<compile_context>
chip_gen: v7x
topology: tpu7x:2x2x1
jax: 0.10.0
libtpu: 0.0.40
codegen_flags: <defaults>
</compile_context>

<pallas_src>
import numpy as np
import jax
import jax.numpy as jnp
from jax.experimental import pallas as pl
from jax.experimental.pallas import tpu as pltpu


# ----------------------------------------------------------------------------
# Host-side constant matrices (built once, become VMEM-resident kernel consts)
# ----------------------------------------------------------------------------
def interp_matrix(out_size, in_size):
    """1-D PyTorch F.interpolate(mode='bilinear', align_corners=False) matrix."""
    A = np.zeros((out_size, in_size), dtype=np.float32)
    scale = in_size / out_size
    for i in range(out_size):
        src = (i + 0.5) * scale - 0.5
        src = max(src, 0.0)
        i0 = min(int(np.floor(src)), in_size - 1)
        i1 = min(i0 + 1, in_size - 1)
        lam = src - i0
        A[i, i0] += 1.0 - lam
        A[i, i1] += lam
    return A


def upsample_matrix_T(hi, wi, ho, wo):
    """Right-mul matrix: maps (C, hi*wi) @ M -> (C, ho*wo) separable bilinear."""
    Ah = interp_matrix(ho, hi)                    # (ho, hi)
    Aw = interp_matrix(wo, wi)                    # (wo, wi)
    M = np.kron(Ah, Aw)                           # (ho*wo, hi*wi)
    return np.ascontiguousarray(M.T)              # (hi*wi, ho*wo)


def subsample_matrix(h, w, stride):
    """Right-mul selector: x(C, h*w) @ D -> (C, (h//s)*(w//s)) == x[:, ::s, ::s]."""
    hs, ws = h // stride, w // stride
    D = np.zeros((h * w, hs * ws), dtype=np.float32)
    for i in range(hs):
        for j in range(ws):
            D[(i * stride) * w + (j * stride), i * ws + j] = 1.0
    return D


# ----------------------------------------------------------------------------
# Parameters (synthetic LRASPP stand-in, torch conv layout: W (Cout, Cin))
# ----------------------------------------------------------------------------
def init_params(key, cin=4, cl=8, ch=16, cm=24, k=5):
    ks = jax.random.split(key, 6)
    w = lambda kk, o, i: jax.random.normal(kk, (o, i), jnp.float32) * 0.1
    b = lambda o: jnp.zeros((o, 1), jnp.float32)
    return {
        "backbone_low_w": w(ks[0], cl, cin),  "backbone_low_b": b(cl),
        "backbone_high_w": w(ks[1], ch, cin), "backbone_high_b": b(ch),
        "cbr_w": w(ks[2], cm, ch),            "cbr_b": b(cm),
        "scale_w": w(ks[3], cm, ch),          "scale_b": b(cm),
        "low_cls_w": w(ks[4], k, cl),         "low_cls_b": b(k),
        "high_cls_w": w(ks[5], k, cm),        "high_cls_b": b(k),
    }


# ----------------------------------------------------------------------------
# Wrapper.forward: ONE fused pallas_call, single grid step, batch on lanes
# ----------------------------------------------------------------------------
def wrapper_forward(x_nchw, params):
    N, Cin, H, W = x_nchw.shape
    Hl, Wl = H // 2, W // 2              # low-res feature stride 2
    Hs, Ws_ = H // 4, W // 4             # high-res feature stride 4
    S, SL, SH = H * W, Hl * Wl, Hs * Ws_
    NSL, NSH = N * SL, N * SH
    Cl = params["backbone_low_w"].shape[0]
    Ch = params["backbone_high_w"].shape[0]
    Cm = params["cbr_w"].shape[0]
    K = params["low_cls_w"].shape[0]

    # Channels-first, batch folded onto the lane axis: (Cin, N*H*W).
    # (tiny metadata/XLA transpose outside the kernel; everything inside is
    #  lane-dense over the full batch)
    x2d = x_nchw.transpose(1, 0, 2, 3).reshape(Cin, N * S)

    # ---- block-diagonal (over batch) selector / interp / pooling constants ----
    dl = subsample_matrix(H, W, 2)                 # (S, SL)
    dh = subsample_matrix(H, W, 4)                 # (S, SH)
    dsel = np.zeros((N * S, NSL + NSH), np.float32)
    for n in range(N):
        dsel[n * S:(n + 1) * S, n * SL:(n + 1) * SL] = dl
        dsel[n * S:(n + 1) * S, NSL + n * SH:NSL + (n + 1) * SH] = dh

    m2 = upsample_matrix_T(Hl, Wl, H, W)           # (SL, S)
    m1 = upsample_matrix_T(Hs, Ws_, Hl, Wl)        # (SH, SL)
    m12 = m1 @ m2                                  # (SH, S)  (m1 folded into m2)
    mup = np.zeros((NSL + NSH, N * S), np.float32)
    for n in range(N):
        mup[n * SL:(n + 1) * SL, n * S:(n + 1) * S] = m2
        mup[NSL + n * SH:NSL + (n + 1) * SH, n * S:(n + 1) * S] = m12

    pool = np.zeros((NSH, N), np.float32)          # per-sample spatial mean
    expand = np.zeros((N, NSH), np.float32)        # per-sample lane broadcast
    for n in range(N):
        pool[n * SH:(n + 1) * SH, n] = 1.0 / SH
        expand[n, n * SH:(n + 1) * SH] = 1.0

    # ---- pre-packed weights / biases (fewer inputs, fewer DMAs) ----
    wlh = jnp.concatenate([params["backbone_low_w"], params["backbone_high_w"]], 0)
    blh = jnp.concatenate([params["backbone_low_b"], params["backbone_high_b"]], 0)
    wcs = jnp.concatenate([params["cbr_w"], params["scale_w"]], 0)
    bcs = jnp.concatenate([params["cbr_b"], params["scale_b"]], 0)   # scale bias folded
    bsum = params["low_cls_b"] + params["high_cls_b"]  # both preserved by upsample

    def kernel(x_ref, dsel_ref, wlh_ref, blh_ref, wcs_ref, bcs_ref,
               pool_ref, exp_ref, wlc_ref, whc_ref, bsum_ref, mup_ref, o_ref):
        dot = lambda a, b: jnp.dot(a, b, preferred_element_type=jnp.float32)

        # One selector matmul covers both ::2 and ::4 subsamples for all samples.
        sel = dot(x_ref[...], dsel_ref[...])                  # (Cin, NSL+NSH)

        # Merged low/high backbone 1x1 convs + relu (static slices of one matmul).
        lh = dot(wlh_ref[...], sel) + blh_ref[...]            # (Cl+Ch, NSL+NSH)
        low = jnp.maximum(lh[:Cl, :NSL], 0.0)                 # (Cl, NSL)
        high = jnp.maximum(lh[Cl:, NSL:], 0.0)                # (Ch, NSH)

        # Merged cbr / scale branches (one matmul against `high`).
        cs = dot(wcs_ref[...], high) + bcs_ref[...]           # (2*Cm, NSH)
        cbr = jnp.maximum(cs[:Cm, :], 0.0)                    # (Cm, NSH)
        # Pool AFTER the matmul: mean(Ws@high + bs) == Ws@mean(high) + bs.
        pooled = dot(cs[Cm:, :], pool_ref[...])               # (Cm, N)
        s_exp = dot(jax.nn.sigmoid(pooled), exp_ref[...])     # (Cm, NSH)
        h = cbr * s_exp

        # Classifiers at low resolution (biases added once at the end).
        lo = dot(wlc_ref[...], low)                           # (K, NSL)
        hk = dot(whc_ref[...], h)                             # (K, NSH)

        # Fused bilinear upsamples: two independent lane-dense (K, N*S) matmuls.
        out = (dot(lo, mup_ref[:NSL, :]) + dot(hk, mup_ref[NSL:, :])
               + bsum_ref[...])
        o_ref[...] = out.astype(o_ref.dtype)

    args = (x2d, jnp.asarray(dsel), wlh, blh, wcs, bcs,
            jnp.asarray(pool), jnp.asarray(expand),
            params["low_cls_w"], params["high_cls_w"], bsum, jnp.asarray(mup))

    in_specs = [pl.BlockSpec(a.shape, lambda i: (0, 0)) for a in args]

    out2d = pl.pallas_call(
        kernel,
        out_shape=jax.ShapeDtypeStruct((K, N * S), jnp.float32),
        grid=(1,),
        in_specs=in_specs,
        out_specs=pl.BlockSpec((K, N * S), lambda i: (0, 0)),
        compiler_params=pltpu.CompilerParams(
            dimension_semantics=("arbitrary",)),
    )(*args)

    result = {"out": out2d.reshape(K, N, H, W).transpose(1, 0, 2, 3)}
    return result["out"]                 # Wrapper.forward extracts 'out'


# TODO(synk): Wrapper.threshold_as_input is a training-time hook, not part of
# forward(); its ops (two 1x1 classifiers + add + bilinear) are exactly the tail
# of the fused kernel above, so it is covered structurally but not exposed.


# ----------------------------------------------------------------------------
# Pure-JAX reference (original op ordering) used only for a correctness check
# ----------------------------------------------------------------------------
def reference_forward(x_nchw, params):
    N, Cin, H, W = x_nchw.shape
    Hl, Wl = H // 2, W // 2

    def conv1x1(t, w, b, act=None):
        y = jnp.einsum('nihw,oi->nohw', t, w) + b.reshape(1, -1, 1, 1)
        return jnp.maximum(y, 0.0) if act == 'relu' else y

    def bilinear(t, ho, wo):
        Ah = jnp.asarray(interp_matrix(ho, t.shape[2]))
        Aw = jnp.asarray(interp_matrix(wo, t.shape[3]))
        return jnp.einsum('nchw,oh,pw->ncop', t, Ah, Aw)

    low = conv1x1(x_nchw[:, :, ::2, ::2],
                  params["backbone_low_w"], params["backbone_low_b"], 'relu')
    high = conv1x1(x_nchw[:, :, ::4, ::4],
                   params["backbone_high_w"], params["backbone_high_b"], 'relu')
    cbr = conv1x1(high, params["cbr_w"], params["cbr_b"], 'relu')
    pooled = jnp.mean(high, axis=(2, 3), keepdims=True)
    s = jax.nn.sigmoid(conv1x1(pooled, params["scale_w"], params["scale_b"]))
    h = cbr * s
    h_up = bilinear(h, Hl, Wl)
    out_small = conv1x1(low, params["low_cls_w"], params["low_cls_b"]) + \
                conv1x1(h_up, params["high_cls_w"], params["high_cls_b"])
    return bilinear(out_small, H, W)


if __name__ == "__main__":
    key = jax.random.PRNGKey(0)
    x = jax.random.normal(key, (2, 4, 16, 16), jnp.float32)   # NCHW, like PyTorch
    params = init_params(jax.random.PRNGKey(1))

    out = jax.jit(wrapper_forward)(x, params)
    jax.block_until_ready(out)

    assert out.shape == (2, 5, 16, 16), out.shape
    assert out.dtype == jnp.float32

    ref = reference_forward(x, params)
    assert jnp.allclose(out, ref, atol=1e-4, rtol=1e-4), \
        float(jnp.max(jnp.abs(out - ref)))

    print("KERNEL_OK")
</pallas_src>

<mosaic_0001>
module attributes {stable_mosaic.version = 11 : i64} {
  func.func @kernel(%arg0: i32, %arg1: memref<4x512xf32, #tpu.memory_space<vmem>>, %arg2: memref<512x160xf32, #tpu.memory_space<vmem>>, %arg3: memref<24x4xf32, #tpu.memory_space<vmem>>, %arg4: memref<24x1xf32, #tpu.memory_space<vmem>>, %arg5: memref<48x16xf32, #tpu.memory_space<vmem>>, %arg6: memref<48x1xf32, #tpu.memory_space<vmem>>, %arg7: memref<32x2xf32, #tpu.memory_space<vmem>>, %arg8: memref<2x32xf32, #tpu.memory_space<vmem>>, %arg9: memref<5x8xf32, #tpu.memory_space<vmem>>, %arg10: memref<5x24xf32, #tpu.memory_space<vmem>>, %arg11: memref<5x1xf32, #tpu.memory_space<vmem>>, %arg12: memref<160x512xf32, #tpu.memory_space<vmem>>, %arg13: memref<5x512xf32, #tpu.memory_space<vmem>>) attributes {dimension_semantics = [#tpu.dimension_semantics<arbitrary>], iteration_bounds = array<i64: 1>, scalar_prefetch = 0 : i64, scratch_operands = 0 : i64, tpu.core_type = #tpu.core_type<tc>, window_params = [{pipeline_mode = #tpu.pipeline_mode<synchronous>, transform_indices = @transform_0, window_bounds = array<i64: 4, 512>}, {pipeline_mode = #tpu.pipeline_mode<synchronous>, transform_indices = @transform_1, window_bounds = array<i64: 512, 160>}, {pipeline_mode = #tpu.pipeline_mode<synchronous>, transform_indices = @transform_2, window_bounds = array<i64: 24, 4>}, {pipeline_mode = #tpu.pipeline_mode<synchronous>, transform_indices = @transform_3, window_bounds = array<i64: 24, 1>}, {pipeline_mode = #tpu.pipeline_mode<synchronous>, transform_indices = @transform_4, window_bounds = array<i64: 48, 16>}, {pipeline_mode = #tpu.pipeline_mode<synchronous>, transform_indices = @transform_5, window_bounds = array<i64: 48, 1>}, {pipeline_mode = #tpu.pipeline_mode<synchronous>, transform_indices = @transform_6, window_bounds = array<i64: 32, 2>}, {pipeline_mode = #tpu.pipeline_mode<synchronous>, transform_indices = @transform_7, window_bounds = array<i64: 2, 32>}, {pipeline_mode = #tpu.pipeline_mode<synchronous>, transform_indices = @transform_8, window_bounds = array<i64: 5, 8>}, {pipeline_mode = #tpu.pipeline_mode<synchronous>, transform_indices = @transform_9, window_bounds = array<i64: 5, 24>}, {pipeline_mode = #tpu.pipeline_mode<synchronous>, transform_indices = @transform_10, window_bounds = array<i64: 5, 1>}, {pipeline_mode = #tpu.pipeline_mode<synchronous>, transform_indices = @transform_11, window_bounds = array<i64: 160, 512>}, {pipeline_mode = #tpu.pipeline_mode<synchronous>, transform_indices = @transform_12, window_bounds = array<i64: 5, 512>}]} {
    %c0 = arith.constant 0 : index
    %c0_0 = arith.constant 0 : index
    %0 = vector.load %arg1[%c0, %c0_0] : memref<4x512xf32, #tpu.memory_space<vmem>>, vector<4x512xf32>
    %c0_1 = arith.constant 0 : index
    %c0_2 = arith.constant 0 : index
    %1 = vector.load %arg2[%c0_1, %c0_2] : memref<512x160xf32, #tpu.memory_space<vmem>>, vector<512x160xf32>
    %cst = arith.constant dense<0.000000e+00> : vector<4x160xf32>
    %2 = tpu.matmul %0, %1, %cst {dimension_numbers = #tpu.dot_dimension_numbers<[1], [0], [0], [1], [0, 0, 1, 1], [], []>} : vector<4x512xf32>, vector<512x160xf32>, vector<4x160xf32> -> vector<4x160xf32>
    %c0_3 = arith.constant 0 : index
    %c0_4 = arith.constant 0 : index
    %3 = vector.load %arg3[%c0_3, %c0_4] : memref<24x4xf32, #tpu.memory_space<vmem>>, vector<24x4xf32>
    %cst_5 = arith.constant dense<0.000000e+00> : vector<24x160xf32>
    %4 = tpu.matmul %3, %2, %cst_5 {dimension_numbers = #tpu.dot_dimension_numbers<[1], [0], [0], [1], [0, 0, 1, 1], [], []>} : vector<24x4xf32>, vector<4x160xf32>, vector<24x160xf32> -> vector<24x160xf32>
    %c0_6 = arith.constant 0 : index
    %c0_7 = arith.constant 0 : index
    %5 = vector.load %arg4[%c0_6, %c0_7] : memref<24x1xf32, #tpu.memory_space<vmem>>, vector<24x1xf32>
    %6 = vector.broadcast %5 : vector<24x1xf32> to vector<24x160xf32>
    %7 = arith.addf %4, %6 : vector<24x160xf32>
    %8 = vector.extract_strided_slice %7 {offsets = [0, 0], sizes = [8, 128], strides = [1, 1]} : vector<24x160xf32> to vector<8x128xf32>
    %cst_8 = arith.constant 0.000000e+00 : f32
    %9 = vector.broadcast %cst_8 : f32 to vector<8x128xf32>
    %10 = arith.maximumf %8, %9 : vector<8x128xf32>
    %11 = vector.extract_strided_slice %7 {offsets = [8, 128], sizes = [16, 32], strides = [1, 1]} : vector<24x160xf32> to vector<16x32xf32>
    %cst_9 = arith.constant 0.000000e+00 : f32
    %12 = vector.broadcast %cst_9 : f32 to vector<16x32xf32>
    %13 = arith.maximumf %11, %12 : vector<16x32xf32>
    %c0_10 = arith.constant 0 : index
    %c0_11 = arith.constant 0 : index
    %14 = vector.load %arg5[%c0_10, %c0_11] : memref<48x16xf32, #tpu.memory_space<vmem>>, vector<48x16xf32>
    %cst_12 = arith.constant dense<0.000000e+00> : vector<48x32xf32>
    %15 = tpu.matmul %14, %13, %cst_12 {dimension_numbers = #tpu.dot_dimension_numbers<[1], [0], [0], [1], [0, 0, 1, 1], [], []>} : vector<48x16xf32>, vector<16x32xf32>, vector<48x32xf32> -> vector<48x32xf32>
    %c0_13 = arith.constant 0 : index
    %c0_14 = arith.constant 0 : index
    %16 = vector.load %arg6[%c0_13, %c0_14] : memref<48x1xf32, #tpu.memory_space<vmem>>, vector<48x1xf32>
    %17 = vector.broadcast %16 : vector<48x1xf32> to vector<48x32xf32>
    %18 = arith.addf %15, %17 : vector<48x32xf32>
    %19 = vector.extract_strided_slice %18 {offsets = [0, 0], sizes = [24, 32], strides = [1, 1]} : vector<48x32xf32> to vector<24x32xf32>
    %cst_15 = arith.constant 0.000000e+00 : f32
    %20 = vector.broadcast %cst_15 : f32 to vector<24x32xf32>
    %21 = arith.maximumf %19, %20 : vector<24x32xf32>
    %22 = vector.extract_strided_slice %18 {offsets = [24, 0], sizes = [24, 32], strides = [1, 1]} : vector<48x32xf32> to vector<24x32xf32>
    %c0_16 = arith.constant 0 : index
    %c0_17 = arith.constant 0 : index
    %23 = vector.load %arg7[%c0_16, %c0_17] : memref<32x2xf32, #tpu.memory_space<vmem>>, vector<32x2xf32>
    %cst_18 = arith.constant dense<0.000000e+00> : vector<24x2xf32>
    %24 = tpu.matmul %22, %23, %cst_18 {dimension_numbers = #tpu.dot_dimension_numbers<[1], [0], [0], [1], [0, 0, 1, 1], [], []>} : vector<24x32xf32>, vector<32x2xf32>, vector<24x2xf32> -> vector<24x2xf32>
    %25 = arith.negf %24 : vector<24x2xf32>
    %26 = math.exp %25 : vector<24x2xf32>
    %cst_19 = arith.constant 1.000000e+00 : f32
    %27 = vector.broadcast %cst_19 : f32 to vector<24x2xf32>
    %28 = arith.addf %27, %26 : vector<24x2xf32>
    %29 = arith.divf %27, %28 : vector<24x2xf32>
    %c0_20 = arith.constant 0 : index
    %c0_21 = arith.constant 0 : index
    %30 = vector.load %arg8[%c0_20, %c0_21] : memref<2x32xf32, #tpu.memory_space<vmem>>, vector<2x32xf32>
    %cst_22 = arith.constant dense<0.000000e+00> : vector<24x32xf32>
    %31 = tpu.matmul %29, %30, %cst_22 {dimension_numbers = #tpu.dot_dimension_numbers<[1], [0], [0], [1], [0, 0, 1, 1], [], []>} : vector<24x2xf32>, vector<2x32xf32>, vector<24x32xf32> -> vector<24x32xf32>
    %32 = arith.mulf %21, %31 : vector<24x32xf32>
    %c0_23 = arith.constant 0 : index
    %c0_24 = arith.constant 0 : index
    %33 = vector.load %arg9[%c0_23, %c0_24] : memref<5x8xf32, #tpu.memory_space<vmem>>, vector<5x8xf32>
    %cst_25 = arith.constant dense<0.000000e+00> : vector<5x128xf32>
    %34 = tpu.matmul %33, %10, %cst_25 {dimension_numbers = #tpu.dot_dimension_numbers<[1], [0], [0], [1], [0, 0, 1, 1], [], []>} : vector<5x8xf32>, vector<8x128xf32>, vector<5x128xf32> -> vector<5x128xf32>
    %c0_26 = arith.constant 0 : index
    %c0_27 = arith.constant 0 : index
    %35 = vector.load %arg10[%c0_26, %c0_27] : memref<5x24xf32, #tpu.memory_space<vmem>>, vector<5x24xf32>
    %cst_28 = arith.constant dense<0.000000e+00> : vector<5x32xf32>
    %36 = tpu.matmul %35, %32, %cst_28 {dimension_numbers = #tpu.dot_dimension_numbers<[1], [0], [0], [1], [0, 0, 1, 1], [], []>} : vector<5x24xf32>, vector<24x32xf32>, vector<5x32xf32> -> vector<5x32xf32>
    %c0_29 = arith.constant 0 : index
    %c0_30 = arith.constant 0 : index
    %37 = vector.load %arg12[%c0_29, %c0_30] : memref<160x512xf32, #tpu.memory_space<vmem>>, vector<128x512xf32>
    %cst_31 = arith.constant dense<0.000000e+00> : vector<5x512xf32>
    %38 = tpu.matmul %34, %37, %cst_31 {dimension_numbers = #tpu.dot_dimension_numbers<[1], [0], [0], [1], [0, 0, 1, 1], [], []>} : vector<5x128xf32>, vector<128x512xf32>, vector<5x512xf32> -> vector<5x512xf32>
    %c128 = arith.constant 128 : index
    %c0_32 = arith.constant 0 : index
    %39 = vector.load %arg12[%c128, %c0_32] : memref<160x512xf32, #tpu.memory_space<vmem>>, vector<32x512xf32>
    %cst_33 = arith.constant dense<0.000000e+00> : vector<5x512xf32>
    %40 = tpu.matmul %36, %39, %cst_33 {dimension_numbers = #tpu.dot_dimension_numbers<[1], [0], [0], [1], [0, 0, 1, 1], [], []>} : vector<5x32xf32>, vector<32x512xf32>, vector<5x512xf32> -> vector<5x512xf32>
    %41 = arith.addf %38, %40 : vector<5x512xf32>
    %c0_34 = arith.constant 0 : index
    %c0_35 = arith.constant 0 : index
    %42 = vector.load %arg11[%c0_34, %c0_35] : memref<5x1xf32, #tpu.memory_space<vmem>>, vector<5x1xf32>
    %43 = vector.broadcast %42 : vector<5x1xf32> to vector<5x512xf32>
    %44 = arith.addf %41, %43 : vector<5x512xf32>
    %c0_36 = arith.constant 0 : index
    %c0_37 = arith.constant 0 : index
    %45 = vector.load %arg13[%c0_36, %c0_37] : memref<5x512xf32, #tpu.memory_space<vmem>>, vector<5x512xf32>
    tpu.vector_store %arg13[%c0_36, %c0_37], %44 {strides = array<i32>} : memref<5x512xf32, #tpu.memory_space<vmem>>, vector<5x512xf32>,
    return
  }
  func.func @transform_0(%arg0: i32) -> (i32, i32) {
    %c0_i32 = arith.constant 0 : i32
    %c0_i32_0 = arith.constant 0 : i32
    %c0_i32_1 = arith.constant 0 : i32
    return %c0_i32, %c0_i32_0 : i32, i32
  }
  func.func @transform_1(%arg0: i32) -> (i32, i32) {
    %c0_i32 = arith.constant 0 : i32
    %c0_i32_0 = arith.constant 0 : i32
    %c0_i32_1 = arith.constant 0 : i32
    return %c0_i32, %c0_i32_0 : i32, i32
  }
  func.func @transform_2(%arg0: i32) -> (i32, i32) {
    %c0_i32 = arith.constant 0 : i32
    %c0_i32_0 = arith.constant 0 : i32
    %c0_i32_1 = arith.constant 0 : i32
    return %c0_i32, %c0_i32_0 : i32, i32
  }
  func.func @transform_3(%arg0: i32) -> (i32, i32) {
    %c0_i32 = arith.constant 0 : i32
    %c0_i32_0 = arith.constant 0 : i32
    %c0_i32_1 = arith.constant 0 : i32
    return %c0_i32, %c0_i32_0 : i32, i32
  }
  func.func @transform_4(%arg0: i32) -> (i32, i32) {
    %c0_i32 = arith.constant 0 : i32
    %c0_i32_0 = arith.constant 0 : i32
    %c0_i32_1 = arith.constant 0 : i32
    return %c0_i32, %c0_i32_0 : i32, i32
  }
  func.func @transform_5(%arg0: i32) -> (i32, i32) {
    %c0_i32 = arith.constant 0 : i32
    %c0_i32_0 = arith.constant 0 : i32
    %c0_i32_1 = arith.constant 0 : i32
    return %c0_i32, %c0_i32_0 : i32, i32
  }
  func.func @transform_6(%arg0: i32) -> (i32, i32) {
    %c0_i32 = arith.constant 0 : i32
    %c0_i32_0 = arith.constant 0 : i32
    %c0_i32_1 = arith.constant 0 : i32
    return %c0_i32, %c0_i32_0 : i32, i32
  }
  func.func @transform_7(%arg0: i32) -> (i32, i32) {
    %c0_i32 = arith.constant 0 : i32
    %c0_i32_0 = arith.constant 0 : i32
    %c0_i32_1 = arith.constant 0 : i32
    return %c0_i32, %c0_i32_0 : i32, i32
  }
  func.func @transform_8(%arg0: i32) -> (i32, i32) {
    %c0_i32 = arith.constant 0 : i32
    %c0_i32_0 = arith.constant 0 : i32
    %c0_i32_1 = arith.constant 0 : i32
    return %c0_i32, %c0_i32_0 : i32, i32
  }
  func.func @transform_9(%arg0: i32) -> (i32, i32) {
    %c0_i32 = arith.constant 0 : i32
    %c0_i32_0 = arith.constant 0 : i32
    %c0_i32_1 = arith.constant 0 : i32
    return %c0_i32, %c0_i32_0 : i32, i32
  }
  func.func @transform_10(%arg0: i32) -> (i32, i32) {
    %c0_i32 = arith.constant 0 : i32
    %c0_i32_0 = arith.constant 0 : i32
    %c0_i32_1 = arith.constant 0 : i32
    return %c0_i32, %c0_i32_0 : i32, i32
  }
  func.func @transform_11(%arg0: i32) -> (i32, i32) {
    %c0_i32 = arith.constant 0 : i32
    %c0_i32_0 = arith.constant 0 : i32
    %c0_i32_1 = arith.constant 0 : i32
    return %c0_i32, %c0_i32_0 : i32, i32
  }
  func.func @transform_12(%arg0: i32) -> (i32, i32) {
    %c0_i32 = arith.constant 0 : i32
    %c0_i32_0 = arith.constant 0 : i32
    %c0_i32_1 = arith.constant 0 : i32
    return %c0_i32, %c0_i32_0 : i32, i32
  }
}

</mosaic_0001>

<llo_original>
// kernel: wrapper_forward.1
$region0: #{wrapper_forward.1}
  #allocation0 [shape = 'u32[]', space=smem, size = 0x4, offset = 0x4, fixed_abs, tag = 'smem constant byte address 0x4 - core index']
  #allocation1 [shape = 'u32[144,128]{1,0:T(1,128)}', space=vmem, size = 0x12000, scoped, tag = 'internal scratch']
  %s0 = inlined_call_operand.vmem [shape: f32[4,512], index: 0, kind: input, shape index: {}]
  %s1 = inlined_call_operand.hbm [shape: f32[512,160], index: 1, kind: input, shape index: {}]
  %s2 = inlined_call_operand.vmem [shape: f32[24,4], index: 2, kind: input, shape index: {}]
  %s3 = inlined_call_operand.vmem [shape: f32[24,1], index: 3, kind: input, shape index: {}]
  %s4 = inlined_call_operand.vmem [shape: f32[48,16], index: 4, kind: input, shape index: {}]
  %s5 = inlined_call_operand.vmem [shape: f32[48,1], index: 5, kind: input, shape index: {}]
  %s6 = inlined_call_operand.vmem [shape: f32[32,2], index: 6, kind: input, shape index: {}]
  %s7 = inlined_call_operand.vmem [shape: f32[2,32], index: 7, kind: input, shape index: {}]
  %s8 = inlined_call_operand.vmem [shape: f32[5,8], index: 8, kind: input, shape index: {}]
  %s9 = inlined_call_operand.vmem [shape: f32[5,24], index: 9, kind: input, shape index: {}]
  %s10 = inlined_call_operand.vmem [shape: f32[5,1], index: 10, kind: input, shape index: {}]
  %s11 = inlined_call_operand.vmem [shape: f32[160,512], index: 11, kind: input, shape index: {}]
  %s12 = inlined_call_operand.vmem [shape: f32[5,512], index: 12, kind: output, shape index: {}]
  %s13 = sld [smem:[#allocation0]]
  $region62: #{wrapper_forward.1} parent=0
    _
  %s15 = ssub.s32 1, %s13
  %s16 = scalar_select 0, %s15, %s13
  $region1: #{wrapper_forward.1} parent=0
    #allocation2 [shape = 'u8[524288]{0}', space=vmem, size = 0x80000, scoped, tag = 'input window, operand 1, single buffered']
    #allocation3 [shape = 's32[1]{0}', space=sflag, size = 0x4, scoped, tag = 'scoped memory for wrapper_forward.1']
    %17 = vsyncpa [#allocation3], 0
    // Predicated region
    $region2: #{wrapper_forward.1} parent=1 // pred_check
      _
    $region3: #{wrapper_forward.1} parent=1 // pred_check_branch
      %19 = sbr.rel (0) target = $region5
    $region4: #{wrapper_forward.1} parent=1 // pred_region
      _
    $region5: #{wrapper_forward.1} parent=1 // pred_fallthru
      _
    // Predicated region
    $region6: #{wrapper_forward.1} parent=1 // pred_check
      _
    $region7: #{wrapper_forward.1} parent=1 // pred_check_branch
      %21 = sbr.rel (0) target = $region9
    $region8: #{wrapper_forward.1} parent=1 // pred_region
      %s23 = ssub.s32 16384, 16384
      %24 = vsyncadd [#allocation3], %s23
      %s25 = sshll.u32 [#allocation2], 4
      %s26 = int_to_ptr.vmem [resolvable:$true] %s25
      %31 = dma.hbm_to_vmem [thread:$0]  %s1, 16384, %s26, [#allocation3], 256, 256, 16
    $region9: #{wrapper_forward.1} parent=1 // pred_fallthru
      _
    // Predicated region
    $region10: #{wrapper_forward.1} parent=1 // pred_check
      _
    $region11: #{wrapper_forward.1} parent=1 // pred_check_branch
      %33 = sbr.rel (0) target = $region13
    $region12: #{wrapper_forward.1} parent=1 // pred_region
      _
    $region13: #{wrapper_forward.1} parent=1 // pred_fallthru
      _
    // Predicated region
    $region14: #{wrapper_forward.1} parent=1 // pred_check
      _
    $region15: #{wrapper_forward.1} parent=1 // pred_check_branch
      %35 = sbr.rel (0) target = $region17
    $region16: #{wrapper_forward.1} parent=1 // pred_region
      _
    $region17: #{wrapper_forward.1} parent=1 // pred_fallthru
      _
    // Predicated region
    $region18: #{wrapper_forward.1} parent=1 // pred_check
      _
    $region19: #{wrapper_forward.1} parent=1 // pred_check_branch
      %37 = sbr.rel (0) target = $region21
    $region20: #{wrapper_forward.1} parent=1 // pred_region
      _
    $region21: #{wrapper_forward.1} parent=1 // pred_fallthru
      _
    // Predicated region
    $region22: #{wrapper_forward.1} parent=1 // pred_check
      _
    $region23: #{wrapper_forward.1} parent=1 // pred_check_branch
      %39 = sbr.rel (0) target = $region25
    $region24: #{wrapper_forward.1} parent=1 // pred_region
      _
    $region25: #{wrapper_forward.1} parent=1 // pred_fallthru
      _
    // Predicated region
    $region26: #{wrapper_forward.1} parent=1 // pred_check
      _
    $region27: #{wrapper_forward.1} parent=1 // pred_check_branch
      %41 = sbr.rel (0) target = $region29
    $region28: #{wrapper_forward.1} parent=1 // pred_region
      _
    $region29: #{wrapper_forward.1} parent=1 // pred_fallthru
      _
    // Predicated region
    $region30: #{wrapper_forward.1} parent=1 // pred_check
      _
    $region31: #{wrapper_forward.1} parent=1 // pred_check_branch
      %43 = sbr.rel (0) target = $region33
    $region32: #{wrapper_forward.1} parent=1 // pred_region
      _
    $region33: #{wrapper_forward.1} parent=1 // pred_fallthru
      _
    // Predicated region
    $region34: #{wrapper_forward.1} parent=1 // pred_check
      _
    $region35: #{wrapper_forward.1} parent=1 // pred_check_branch
      %45 = sbr.rel (0) target = $region37
    $region36: #{wrapper_forward.1} parent=1 // pred_region
      _
    $region37: #{wrapper_forward.1} parent=1 // pred_fallthru
      _
    // Predicated region
    $region38: #{wrapper_forward.1} parent=1 // pred_check
      _
    $region39: #{wrapper_forward.1} parent=1 // pred_check_branch
      %47 = sbr.rel (0) target = $region41
    $region40: #{wrapper_forward.1} parent=1 // pred_region
      _
    $region41: #{wrapper_forward.1} parent=1 // pred_fallthru
      _
    // Predicated region
    $region42: #{wrapper_forward.1} parent=1 // pred_check
      _
    $region43: #{wrapper_forward.1} parent=1 // pred_check_branch
      %49 = sbr.rel (0) target = $region45
    $region44: #{wrapper_forward.1} parent=1 // pred_region
      _
    $region45: #{wrapper_forward.1} parent=1 // pred_fallthru
      _
    // Predicated region
    $region46: #{wrapper_forward.1} parent=1 // pred_check
      _
    $region47: #{wrapper_forward.1} parent=1 // pred_check_branch
      %51 = sbr.rel (0) target = $region49
    $region48: #{wrapper_forward.1} parent=1 // pred_region
      _
    $region49: #{wrapper_forward.1} parent=1 // pred_fallthru
      _
    // Predicated region
    $region50: #{wrapper_forward.1} parent=1 // pred_check
      _
    $region51: #{wrapper_forward.1} parent=1 // pred_check_branch
      %53 = sbr.rel (0) target = $region53
    $region52: #{wrapper_forward.1} parent=1 // pred_region
      %54 = dma.done [#allocation3], 16384
    $region53: #{wrapper_forward.1} parent=1 // pred_fallthru
      _
    %v55 = vld [vmem:[%s0] sm:$0xff]
    %v56 = vld [vmem:[%s0 + $0x8] sm:$0xff]
    %v57 = vld [vmem:[#allocation2] sm:$0xff]
    %v58 = vld [vmem:[#allocation2 + $0x8] sm:$0xff]
    %v59 = vld [vmem:[#allocation2 + $0x10] sm:$0xff]
    %v60 = vld [vmem:[#allocation2 + $0x18] sm:$0xff]
    %v61 = vld [vmem:[#allocation2 + $0x20] sm:$0xff]
    %v62 = vld [vmem:[#allocation2 + $0x28] sm:$0xff]
    %v63 = vld [vmem:[#allocation2 + $0x30] sm:$0xff]
    %v64 = vld [vmem:[#allocation2 + $0x38] sm:$0xff]
    %v65 = vld [vmem:[#allocation2 + $0x40] sm:$0xff]
    %v66 = vld [vmem:[#allocation2 + $0x48] sm:$0xff]
    %v67 = vld [vmem:[#allocation2 + $0x50] sm:$0xff]
    %v68 = vld [vmem:[#allocation2 + $0x58] sm:$0xff]
    %v69 = vld [vmem:[#allocation2 + $0x60] sm:$0xff]
    %v70 = vld [vmem:[#allocation2 + $0x68] sm:$0xff]
    %v71 = vld [vmem:[#allocation2 + $0x70] sm:$0xff]
    %v72 = vld [vmem:[#allocation2 + $0x78] sm:$0xff]
    %v73 = vld [vmem:[#allocation2 + $0x80] sm:$0xff]
    %v74 = vld [vmem:[#allocation2 + $0x88] sm:$0xff]
    %v75 = vld [vmem:[#allocation2 + $0x90] sm:$0xff]
    %v76 = vld [vmem:[#allocation2 + $0x98] sm:$0xff]
    %v77 = vld [vmem:[#allocation2 + $0xa0] sm:$0xff]
    %v78 = vld [vmem:[#allocation2 + $0xa8] sm:$0xff]
    %v79 = vld [vmem:[#allocation2 + $0xb0] sm:$0xff]
    %v80 = vld [vmem:[#allocation2 + $0xb8] sm:$0xff]
    %v81 = vld [vmem:[#allocation2 + $0xc0] sm:$0xff]
    %v82 = vld [vmem:[#allocation2 + $0xc8] sm:$0xff]
    %v83 = vld [vmem:[#allocation2 + $0xd0] sm:$0xff]
    %v84 = vld [vmem:[#allocation2 + $0xd8] sm:$0xff]
    %v85 = vld [vmem:[#allocation2 + $0xe0] sm:$0xff]
    %v86 = vld [vmem:[#allocation2 + $0xe8] sm:$0xff]
    %v87 = vld [vmem:[#allocation2 + $0xf0] sm:$0xff]
    %v88 = vld [vmem:[#allocation2 + $0xf8] sm:$0xff]
    %v89 = vld [vmem:[#allocation2 + $0x100] sm:$0xff]
    %v90 = vld [vmem:[#allocation2 + $0x108] sm:$0xff]
    %v91 = vld [vmem:[#allocation2 + $0x110] sm:$0xff]
    %v92 = vld [vmem:[#allocation2 + $0x118] sm:$0xff]
    %v93 = vld [vmem:[#allocation2 + $0x120] sm:$0xff]
    %v94 = vld [vmem:[#allocation2 + $0x128] sm:$0xff]
    %v95 = vld [vmem:[#allocation2 + $0x130] sm:$0xff]
    %v96 = vld [vmem:[#allocation2 + $0x138] sm:$0xff]
    %v97 = vld [vmem:[#allocation2 + $0x140] sm:$0xff]
    %v98 = vld [vmem:[#allocation2 + $0x148] sm:$0xff]
    %v99 = vld [vmem:[#allocation2 + $0x150] sm:$0xff]
    %v100 = vld [vmem:[#allocation2 + $0x158] sm:$0xff]
    %v101 = vld [vmem:[#allocation2 + $0x160] sm:$0xff]
    %v102 = vld [vmem:[#allocation2 + $0x168] sm:$0xff]
    %v103 = vld [vmem:[#allocation2 + $0x170] sm:$0xff]
    %v104 = vld [vmem:[#allocation2 + $0x178] sm:$0xff]
    %v105 = vld [vmem:[#allocation2 + $0x180] sm:$0xff]
    %v106 = vld [vmem:[#allocation2 + $0x188] sm:$0xff]
    %v107 = vld [vmem:[#allocation2 + $0x190] sm:$0xff]
    %v108 = vld [vmem:[#allocation2 + $0x198] sm:$0xff]
    %v109 = vld [vmem:[#allocation2 + $0x1a0] sm:$0xff]
    %v110 = vld [vmem:[#allocation2 + $0x1a8] sm:$0xff]
    %v111 = vld [vmem:[#allocation2 + $0x1b0] sm:$0xff]
    %v112 = vld [vmem:[#allocation2 + $0x1b8] sm:$0xff]
    %v113 = vld [vmem:[#allocation2 + $0x1c0] sm:$0xff]
    %v114 = vld [vmem:[#allocation2 + $0x1c8] sm:$0xff]
    %v115 = vld [vmem:[#allocation2 + $0x1d0] sm:$0xff]
    %v116 = vld [vmem:[#allocation2 + $0x1d8] sm:$0xff]
    %v117 = vld [vmem:[#allocation2 + $0x1e0] sm:$0xff]
    %v118 = vld [vmem:[#allocation2 + $0x1e8] sm:$0xff]
    %v119 = vld [vmem:[#allocation2 + $0x1f0] sm:$0xff]
    %v120 = vld [vmem:[#allocation2 + $0x1f8] sm:$0xff]
    %v121 = vld [vmem:[#allocation2 + $0x200] sm:$0xff]
    %v122 = vld [vmem:[#allocation2 + $0x208] sm:$0xff]
    %v123 = vld [vmem:[#allocation2 + $0x210] sm:$0xff]
    %v124 = vld [vmem:[#allocation2 + $0x218] sm:$0xff]
    %v125 = vld [vmem:[#allocation2 + $0x220] sm:$0xff]
    %v126 = vld [vmem:[#allocation2 + $0x228] sm:$0xff]
    %v127 = vld [vmem:[#allocation2 + $0x230] sm:$0xff]
    %v128 = vld [vmem:[#allocation2 + $0x238] sm:$0xff]
    %v129 = vld [vmem:[#allocation2 + $0x240] sm:$0xff]
    %v130 = vld [vmem:[#allocation2 + $0x248] sm:$0xff]
    %v131 = vld [vmem:[#allocation2 + $0x250] sm:$0xff]
    %v132 = vld [vmem:[#allocation2 + $0x258] sm:$0xff]
    %v133 = vld [vmem:[#allocation2 + $0x260] sm:$0xff]
    %v134 = vld [vmem:[#allocation2 + $0x268] sm:$0xff]
    %v135 = vld [vmem:[#allocation2 + $0x270] sm:$0xff]
    %v136 = vld [vmem:[#allocation2 + $0x278] sm:$0xff]
    %v137 = vld [vmem:[#allocation2 + $0x280] sm:$0xff]
    %v138 = vld [vmem:[#allocation2 + $0x288] sm:$0xff]
    %v139 = vld [vmem:[#allocation2 + $0x290] sm:$0xff]
    %v140 = vld [vmem:[#allocation2 + $0x298] sm:$0xff]
    %v141 = vld [vmem:[#allocation2 + $0x2a0] sm:$0xff]
    %v142 = vld [vmem:[#allocation2 + $0x2a8] sm:$0xff]
    %v143 = vld [vmem:[#allocation2 + $0x2b0] sm:$0xff]
    %v144 = vld [vmem:[#allocation2 + $0x2b8] sm:$0xff]
    %v145 = vld [vmem:[#allocation2 + $0x2c0] sm:$0xff]
    %v146 = vld [vmem:[#allocation2 + $0x2c8] sm:$0xff]
    %v147 = vld [vmem:[#allocation2 + $0x2d0] sm:$0xff]
    %v148 = vld [vmem:[#allocation2 + $0x2d8] sm:$0xff]
    %v149 = vld [vmem:[#allocation2 + $0x2e0] sm:$0xff]
    %v150 = vld [vmem:[#allocation2 + $0x2e8] sm:$0xff]
    %v151 = vld [vmem:[#allocation2 + $0x2f0] sm:$0xff]
    %v152 = vld [vmem:[#allocation2 + $0x2f8] sm:$0xff]
    %v153 = vld [vmem:[#allocation2 + $0x300] sm:$0xff]
    %v154 = vld [vmem:[#allocation2 + $0x308] sm:$0xff]
    %v155 = vld [vmem:[#allocation2 + $0x310] sm:$0xff]
    %v156 = vld [vmem:[#allocation2 + $0x318] sm:$0xff]
    %v157 = vld [vmem:[#allocation2 + $0x320] sm:$0xff]
    %v158 = vld [vmem:[#allocation2 + $0x328] sm:$0xff]
    %v159 = vld [vmem:[#allocation2 + $0x330] sm:$0xff]
    %v160 = vld [vmem:[#allocation2 + $0x338] sm:$0xff]
    %v161 = vld [vmem:[#allocation2 + $0x340] sm:$0xff]
    %v162 = vld [vmem:[#allocation2 + $0x348] sm:$0xff]
    %v163 = vld [vmem:[#allocation2 + $0x350] sm:$0xff]
    %v164 = vld [vmem:[#allocation2 + $0x358] sm:$0xff]
    %v165 = vld [vmem:[#allocation2 + $0x360] sm:$0xff]
    %v166 = vld [vmem:[#allocation2 + $0x368] sm:$0xff]
    %v167 = vld [vmem:[#allocation2 + $0x370] sm:$0xff]
    %v168 = vld [vmem:[#allocation2 + $0x378] sm:$0xff]
    %v169 = vld [vmem:[#allocation2 + $0x380] sm:$0xff]
    %v170 = vld [vmem:[#allocation2 + $0x388] sm:$0xff]
    %v171 = vld [vmem:[#allocation2 + $0x390] sm:$0xff]
    %v172 = vld [vmem:[#allocation2 + $0x398] sm:$0xff]
    %v173 = vld [vmem:[#allocation2 + $0x3a0] sm:$0xff]
    %v174 = vld [vmem:[#allocation2 + $0x3a8] sm:$0xff]
    %v175 = vld [vmem:[#allocation2 + $0x3b0] sm:$0xff]
    %v176 = vld [vmem:[#allocation2 + $0x3b8] sm:$0xff]
    %v177 = vld [vmem:[#allocation2 + $0x3c0] sm:$0xff]
    %v178 = vld [vmem:[#allocation2 + $0x3c8] sm:$0xff]
    %v179 = vld [vmem:[#allocation2 + $0x3d0] sm:$0xff]
    %v180 = vld [vmem:[#allocation2 + $0x3d8] sm:$0xff]
    %v181 = vld [vmem:[#allocation2 + $0x3e0] sm:$0xff]
    %v182 = vld [vmem:[#allocation2 + $0x3e8] sm:$0xff]
    %v183 = vld [vmem:[#allocation2 + $0x3f0] sm:$0xff]
    %v184 = vld [vmem:[#allocation2 + $0x3f8] sm:$0xff]
    %v187 = vcombine.high %v55, %v55
    %v188 = vcombine.high %v56, %v56
    %191 = vmatprep.subr.mxu0 %v58
    %192 = vmatpush1.msra.mxu0 %v57
    %193 = vmatprep.subr.mxu0 %v60
    %194 = vmatpush1.msra.mxu0 %v59
    %195 = vmatprep.subr.mxu0 %v62
    %196 = vmatpush1.msra.mxu0 %v61
    %197 = vmatprep.subr.mxu0 %v64
    %198 = vmatpush1.msra.mxu0 %v63
    %199 = vmatprep.subr.mxu0 %v66
    %200 = vmatpush1.msra.mxu0 %v65
    %201 = vmatprep.subr.mxu0 %v68
    %202 = vmatpush1.msra.mxu0 %v67
    %203 = vmatprep.subr.mxu0 %v70
    %204 = vmatpush1.msra.mxu0 %v69
    %205 = vmatprep.subr.mxu0 %v72
    %206 = vmatpush1.msra.mxu0 %v71
    %207 = vmatprep.subr.mxu0 %v74
    %208 = vmatpush1.msra.mxu0 %v73
    %209 = vmatprep.subr.mxu0 %v76
    %210 = vmatpush1.msra.mxu0 %v75
    %211 = vmatprep.subr.mxu0 %v78
    %212 = vmatpush1.msra.mxu0 %v77
    %213 = vmatprep.subr.mxu0 %v80
    %214 = vmatpush1.msra.mxu0 %v79
    %215 = vmatprep.subr.mxu0 %v82
    %216 = vmatpush1.msra.mxu0 %v81
    %217 = vmatprep.subr.mxu0 %v84
    %218 = vmatpush1.msra.mxu0 %v83
    %219 = vmatprep.subr.mxu0 %v86
    %220 = vmatpush1.msra.mxu0 %v85
    %221 = vmatprep.subr.mxu0 %v88
    %222 = vmatpush1.msra.mxu0 %v87
    %223 = vmatprep.subr.mxu0 %v90
    %224 = vmatpush1.msra.mxu0 %v89
    %225 = vmatprep.subr.mxu0 %v92
    %226 = vmatpush1.msra.mxu0 %v91
    %227 = vmatprep.subr.mxu0 %v94
    %228 = vmatpush1.msra.mxu0 %v93
    %229 = vmatprep.subr.mxu0 %v96
    %230 = vmatpush1.msra.mxu0 %v95
    %231 = vmatprep.subr.mxu0 %v98
    %232 = vmatpush1.msra.mxu0 %v97
    %233 = vmatprep.subr.mxu0 %v100
    %234 = vmatpush1.msra.mxu0 %v99
    %235 = vmatprep.subr.mxu0 %v102
    %236 = vmatpush1.msra.mxu0 %v101
    %237 = vmatprep.subr.mxu0 %v104
    %238 = vmatpush1.msra.mxu0 %v103
    %239 = vmatprep.subr.mxu0 %v106
    %240 = vmatpush1.msra.mxu0 %v105
    %241 = vmatprep.subr.mxu0 %v108
    %242 = vmatpush1.msra.mxu0 %v107
    %243 = vmatprep.subr.mxu0 %v110
    %244 = vmatpush1.msra.mxu0 %v109
    %245 = vmatprep.subr.mxu0 %v112
    %246 = vmatpush1.msra.mxu0 %v111
    %247 = vmatprep.subr.mxu0 %v114
    %248 = vmatpush1.msra.mxu0 %v113
    %249 = vmatprep.subr.mxu0 %v116
    %250 = vmatpush1.msra.mxu0 %v115
    %251 = vmatprep.subr.mxu0 %v118
    %252 = vmatpush1.msra.mxu0 %v117
    %253 = vmatprep.subr.mxu0 %v120
    %254 = vmatpush1.msra.mxu0 %v119
    %255 = vmatprep.mubr.f32.mxu0 %v187
    %256 = vmatmul.mubr.f32.gmra.mrb[0].mxu0 %v55
    %v257 = vpop.f32.mrb[0].mxu0
    %v258 = vadd.f32 0.0, %v257
    %v259 = vpop.f32.mrb[0].mxu0
    %v260 = vadd.f32 0.0, %v259
    %261 = vdwg.mxu0
    %262 = vmatprep.subr.mxu0 %v122
    %263 = vmatpush1.msra.mxu0 %v121
    %264 = vmatprep.subr.mxu0 %v124
    %265 = vmatpush1.msra.mxu0 %v123
    %266 = vmatprep.subr.mxu0 %v126
    %267 = vmatpush1.msra.mxu0 %v125
    %268 = vmatprep.subr.mxu0 %v128
    %269 = vmatpush1.msra.mxu0 %v127
    %270 = vmatprep.subr.mxu0 %v130
    %271 = vmatpush1.msra.mxu0 %v129
    %272 = vmatprep.subr.mxu0 %v132
    %273 = vmatpush1.msra.mxu0 %v131
    %274 = vmatprep.subr.mxu0 %v134
    %275 = vmatpush1.msra.mxu0 %v133
    %276 = vmatprep.subr.mxu0 %v136
    %277 = vmatpush1.msra.mxu0 %v135
    %278 = vmatprep.subr.mxu0 %v138
    %279 = vmatpush1.msra.mxu0 %v137
    %280 = vmatprep.subr.mxu0 %v140
    %281 = vmatpush1.msra.mxu0 %v139
    %282 = vmatprep.subr.mxu0 %v142
    %283 = vmatpush1.msra.mxu0 %v141
    %284 = vmatprep.subr.mxu0 %v144
    %285 = vmatpush1.msra.mxu0 %v143
    %286 = vmatprep.subr.mxu0 %v146
    %287 = vmatpush1.msra.mxu0 %v145
    %288 = vmatprep.subr.mxu0 %v148
    %289 = vmatpush1.msra.mxu0 %v147
    %290 = vmatprep.subr.mxu0 %v150
    %291 = vmatpush1.msra.mxu0 %v149
    %292 = vmatprep.subr.mxu0 %v152
    %293 = vmatpush1.msra.mxu0 %v151
    %294 = vmatprep.subr.mxu0 %v154
    %295 = vmatpush1.msra.mxu0 %v153
    %296 = vmatprep.subr.mxu0 %v156
    %297 = vmatpush1.msra.mxu0 %v155
    %298 = vmatprep.subr.mxu0 %v158
    %299 = vmatpush1.msra.mxu0 %v157
    %300 = vmatprep.subr.mxu0 %v160
    %301 = vmatpush1.msra.mxu0 %v159
    %302 = vmatprep.subr.mxu0 %v162
    %303 = vmatpush1.msra.mxu0 %v161
    %304 = vmatprep.subr.mxu0 %v164
    %305 = vmatpush1.msra.mxu0 %v163
    %306 = vmatprep.subr.mxu0 %v166
    %307 = vmatpush1.msra.mxu0 %v165
    %308 = vmatprep.subr.mxu0 %v168
    %309 = vmatpush1.msra.mxu0 %v167
    %310 = vmatprep.subr.mxu0 %v170
    %311 = vmatpush1.msra.mxu0 %v169
    %312 = vmatprep.subr.mxu0 %v172
    %313 = vmatpush1.msra.mxu0 %v171
    %314 = vmatprep.subr.mxu0 %v174
    %315 = vmatpush1.msra.mxu0 %v173
    %316 = vmatprep.subr.mxu0 %v176
    %317 = vmatpush1.msra.mxu0 %v175
    %318 = vmatprep.subr.mxu0 %v178
    %319 = vmatpush1.msra.mxu0 %v177
    %320 = vmatprep.subr.mxu0 %v180
    %321 = vmatpush1.msra.mxu0 %v179
    %322 = vmatprep.subr.mxu0 %v182
    %323 = vmatpush1.msra.mxu0 %v181
    %324 = vmatprep.subr.mxu0 %v184
    %325 = vmatpush1.msra.mxu0 %v183
    %326 = vmatprep.mubr.f32.mxu0 %v188
    %327 = vmatmul.mubr.f32.gmra.mrb[0].mxu0 %v56
    %v328 = vpop.f32.mrb[0].mxu0
    %v329 = vadd.f32 %v258, %v328
    %v330 = vpop.f32.mrb[0].mxu0
    %v331 = vadd.f32 %v260, %v330
    %332 = vdwg.mxu0
    %v333 = vld [vmem:[%s2] sm:$0xff]
    %v334 = vld [vmem:[%s2 + $0x8] sm:$0xff]
    %v335 = vld [vmem:[%s2 + $0x10] sm:$0xff]
    %v336 = vld [vmem:[%s3] sm:$0xff]
    %v337 = vld [vmem:[%s3 + $0x8] sm:$0xff]
    %v338 = vld [vmem:[%s3 + $0x10] sm:$0xff]
    %340 = vset.pattern.permute.xlu0 0
    %341 = vperm.xlu0 %340, %v336
    %v342 = vpop.permute.xlu0 %341
    %345 = vset.pattern.permute.xlu0 0
    %346 = vperm.xlu0 %345, %v337
    %v347 = vpop.permute.xlu0 %346
    %350 = vset.pattern.permute.xlu0 0
    %351 = vperm.xlu0 %350, %v338
    %v352 = vpop.permute.xlu0 %351
    %vm354 = vcmask 31744
    %v356 = vsel %vm354, %v333, 0
    %v359 = vsel %vm354, %v334, 0
    %v362 = vsel %vm354, %v335, 0
    %vm364 = vcmask 1043456
    %v366 = vsel %vm364, %v329, 0
    %v369 = vsel %vm364, %v331, 0
    %371 = vmatprep.subr.mxu0 %v369
    %372 = vmatpush1.msra.mxu0 %v366
    %373 = vmatprep.subr.mxu0 0.0
    %374 = vmatpush1.msra.mxu0 0.0
    %375 = vmatprep.subr.mxu0 0.0
    %376 = vmatpush1.msra.mxu0 0.0
    %377 = vmatprep.subr.mxu0 0.0
    %378 = vmatpush1.msra.mxu0 0.0
    %379 = vmatprep.subr.mxu0 0.0
    %380 = vmatpush1.msra.mxu0 0.0
    %381 = vmatprep.subr.mxu0 0.0
    %382 = vmatpush1.msra.mxu0 0.0
    %383 = vmatprep.subr.mxu0 0.0
    %384 = vmatpush1.msra.mxu0 0.0
    %385 = vmatprep.subr.mxu0 0.0
    %386 = vmatpush1.msra.mxu0 0.0
    %387 = vmatprep.subr.mxu0 0.0
    %388 = vmatpush1.msra.mxu0 0.0
    %389 = vmatprep.subr.mxu0 0.0
    %390 = vmatpush1.msra.mxu0 0.0
    %391 = vmatprep.subr.mxu0 0.0
    %392 = vmatpush1.msra.mxu0 0.0
    %393 = vmatprep.subr.mxu0 0.0
    %394 = vmatpush1.msra.mxu0 0.0
    %395 = vmatprep.subr.mxu0 0.0
    %396 = vmatpush1.msra.mxu0 0.0
    %397 = vmatprep.subr.mxu0 0.0
    %398 = vmatpush1.msra.mxu0 0.0
    %399 = vmatprep.subr.mxu0 0.0
    %400 = vmatpush1.msra.mxu0 0.0
    %401 = vmatprep.subr.mxu0 0.0
    %402 = vmatpush1.msra.mxu0 0.0
    %403 = vmatprep.subr.mxu0 0.0
    %404 = vmatpush1.msra.mxu0 0.0
    %405 = vmatprep.subr.mxu0 0.0
    %406 = vmatpush1.msra.mxu0 0.0
    %407 = vmatprep.subr.mxu0 0.0
    %408 = vmatpush1.msra.mxu0 0.0
    %409 = vmatprep.subr.mxu0 0.0
    %410 = vmatpush1.msra.mxu0 0.0
    %411 = vmatprep.subr.mxu0 0.0
    %412 = vmatpush1.msra.mxu0 0.0
    %413 = vmatprep.subr.mxu0 0.0
    %414 = vmatpush1.msra.mxu0 0.0
    %415 = vmatprep.subr.mxu0 0.0
    %416 = vmatpush1.msra.mxu0 0.0
    %417 = vmatprep.subr.mxu0 0.0
    %418 = vmatpush1.msra.mxu0 0.0
    %419 = vmatprep.subr.mxu0 0.0
    %420 = vmatpush1.msra.mxu0 0.0
    %421 = vmatprep.subr.mxu0 0.0
    %422 = vmatpush1.msra.mxu0 0.0
    %423 = vmatprep.subr.mxu0 0.0
    %424 = vmatpush1.msra.mxu0 0.0
    %425 = vmatprep.subr.mxu0 0.0
    %426 = vmatpush1.msra.mxu0 0.0
    %427 = vmatprep.subr.mxu0 0.0
    %428 = vmatpush1.msra.mxu0 0.0
    %429 = vmatprep.subr.mxu0 0.0
    %430 = vmatpush1.msra.mxu0 0.0
    %431 = vmatprep.subr.mxu0 0.0
    %432 = vmatpush1.msra.mxu0 0.0
    %433 = vmatprep.subr.mxu0 0.0
    %434 = vmatpush1.msra.mxu0 0.0
    %435 = vmatprep.mubr.f32.mxu0 0.0
    %436 = vmatmul.mubr.f32.gmra.mrb[0].mxu0 %v356
    %v437 = vpop.f32.mrb[0].mxu0
    %v438 = vadd.f32 %v342, %v437
    %v439 = vpop.f32.mrb[0].mxu0
    %440 = vmatprep.mubr.f32.mxu0 0.0
    %441 = vmatmul.mubr.f32.gmra.mrb[0].mxu0 %v359
    %v442 = vpop.f32.mrb[0].mxu0
    %v443 = vpop.f32.mrb[0].mxu0
    %v444 = vadd.f32 %v347, %v443
    %445 = vmatprep.mubr.f32.mxu0 0.0
    %446 = vmatmul.mubr.f32.gmra.mrb[0].mxu0 %v362
    %v447 = vpop.f32.mrb[0].mxu0
    %v448 = vpop.f32.mrb[0].mxu0
    %v449 = vadd.f32 %v352, %v448
    %450 = vdwg.mxu0
    %v451 = vmax.f32 %v438, 0.0
    %v452 = vmax.f32 %v444, 0.0
    %v453 = vmax.f32 %v449, 0.0
    %v454 = vld [vmem:[%s4] sm:$0xff]
    %v455 = vld [vmem:[%s4 + $0x8] sm:$0xff]
    %v456 = vld [vmem:[%s4 + $0x10] sm:$0xff]
    %v457 = vld [vmem:[%s4 + $0x18] sm:$0xff]
    %v458 = vld [vmem:[%s4 + $0x20] sm:$0xff]
    %v459 = vld [vmem:[%s4 + $0x28] sm:$0xff]
    %v460 = vld [vmem:[%s5] sm:$0xff]
    %v461 = vld [vmem:[%s5 + $0x8] sm:$0xff]
    %v462 = vld [vmem:[%s5 + $0x10] sm:$0xff]
    %v463 = vld [vmem:[%s5 + $0x18] sm:$0xff]
    %v464 = vld [vmem:[%s5 + $0x20] sm:$0xff]
    %v465 = vld [vmem:[%s5 + $0x28] sm:$0xff]
    %467 = vset.pattern.permute.xlu0 0
    %468 = vperm.xlu0 %467, %v460
    %v469 = vpop.permute.xlu0 %468
    %472 = vset.pattern.permute.xlu0 0
    %473 = vperm.xlu0 %472, %v461
    %v474 = vpop.permute.xlu0 %473
    %477 = vset.pattern.permute.xlu0 0
    %478 = vperm.xlu0 %477, %v462
    %v479 = vpop.permute.xlu0 %478
    %482 = vset.pattern.permute.xlu0 0
    %483 = vperm.xlu0 %482, %v463
    %v484 = vpop.permute.xlu0 %483
    %487 = vset.pattern.permute.xlu0 0
    %488 = vperm.xlu0 %487, %v464
    %v489 = vpop.permute.xlu0 %488
    %492 = vset.pattern.permute.xlu0 0
    %493 = vperm.xlu0 %492, %v465
    %v494 = vpop.permute.xlu0 %493
    %vm496 = vcmask 130048
    %v498 = vsel %vm496, %v454, 0
    %v501 = vsel %vm496, %v455, 0
    %v504 = vsel %vm496, %v456, 0
    %v507 = vsel %vm496, %v457, 0
    %v510 = vsel %vm496, %v458, 0
    %v513 = vsel %vm496, %v459, 0
    %515 = vmatprep.subr.mxu0 0.0
    %516 = vmatpush1.msra.mxu0 %v452
    %517 = vmatprep.subr.mxu0 0.0
    %518 = vmatpush1.msra.mxu0 %v453
    %519 = vmatprep.subr.mxu0 0.0
    %520 = vmatpush1.msra.mxu0 0.0
    %521 = vmatprep.subr.mxu0 0.0
    %522 = vmatpush1.msra.mxu0 0.0
    %523 = vmatprep.subr.mxu0 0.0
    %524 = vmatpush1.msra.mxu0 0.0
    %525 = vmatprep.subr.mxu0 0.0
    %526 = vmatpush1.msra.mxu0 0.0
    %527 = vmatprep.subr.mxu0 0.0
    %528 = vmatpush1.msra.mxu0 0.0
    %529 = vmatprep.subr.mxu0 0.0
    %530 = vmatpush1.msra.mxu0 0.0
    %531 = vmatprep.subr.mxu0 0.0
    %532 = vmatpush1.msra.mxu0 0.0
    %533 = vmatprep.subr.mxu0 0.0
    %534 = vmatpush1.msra.mxu0 0.0
    %535 = vmatprep.subr.mxu0 0.0
    %536 = vmatpush1.msra.mxu0 0.0
    %537 = vmatprep.subr.mxu0 0.0
    %538 = vmatpush1.msra.mxu0 0.0
    %539 = vmatprep.subr.mxu0 0.0
    %540 = vmatpush1.msra.mxu0 0.0
    %541 = vmatprep.subr.mxu0 0.0
    %542 = vmatpush1.msra.mxu0 0.0
    %543 = vmatprep.subr.mxu0 0.0
    %544 = vmatpush1.msra.mxu0 0.0
    %545 = vmatprep.subr.mxu0 0.0
    %546 = vmatpush1.msra.mxu0 0.0
    %547 = vmatprep.subr.mxu0 0.0
    %548 = vmatpush1.msra.mxu0 0.0
    %549 = vmatprep.subr.mxu0 0.0
    %550 = vmatpush1.msra.mxu0 0.0
    %551 = vmatprep.subr.mxu0 0.0
    %552 = vmatpush1.msra.mxu0 0.0
    %553 = vmatprep.subr.mxu0 0.0
    %554 = vmatpush1.msra.mxu0 0.0
    %555 = vmatprep.subr.mxu0 0.0
    %556 = vmatpush1.msra.mxu0 0.0
    %557 = vmatprep.subr.mxu0 0.0
    %558 = vmatpush1.msra.mxu0 0.0
    %559 = vmatprep.subr.mxu0 0.0
    %560 = vmatpush1.msra.mxu0 0.0
    %561 = vmatprep.subr.mxu0 0.0
    %562 = vmatpush1.msra.mxu0 0.0
    %563 = vmatprep.subr.mxu0 0.0
    %564 = vmatpush1.msra.mxu0 0.0
    %565 = vmatprep.subr.mxu0 0.0
    %566 = vmatpush1.msra.mxu0 0.0
    %567 = vmatprep.subr.mxu0 0.0
    %568 = vmatpush1.msra.mxu0 0.0
    %569 = vmatprep.subr.mxu0 0.0
    %570 = vmatpush1.msra.mxu0 0.0
    %571 = vmatprep.subr.mxu0 0.0
    %572 = vmatpush1.msra.mxu0 0.0
    %573 = vmatprep.subr.mxu0 0.0
    %574 = vmatpush1.msra.mxu0 0.0
    %575 = vmatprep.subr.mxu0 0.0
    %576 = vmatpush1.msra.mxu0 0.0
    %577 = vmatprep.subr.mxu0 0.0
    %578 = vmatpush1.msra.mxu0 0.0
    %579 = vmatprep.mubr.f32.mxu0 0.0
    %580 = vmatmul.mubr.f32.gmra.mrb[0].mxu0 %v498
    %v581 = vpop.f32.mrb[0].mxu0
    %v582 = vadd.f32 %v469, %v581
    %v583 = vpop.f32.mrb[0].mxu0
    %584 = vmatprep.mubr.f32.mxu0 0.0
    %585 = vmatmul.mubr.f32.gmra.mrb[0].mxu0 %v501
    %v586 = vpop.f32.mrb[0].mxu0
    %v587 = vadd.f32 %v474, %v586
    %v588 = vpop.f32.mrb[0].mxu0
    %589 = vmatprep.mubr.f32.mxu0 0.0
    %590 = vmatmul.mubr.f32.gmra.mrb[0].mxu0 %v504
    %v591 = vpop.f32.mrb[0].mxu0
    %v592 = vadd.f32 %v479, %v591
    %v593 = vpop.f32.mrb[0].mxu0
    %594 = vmatprep.mubr.f32.mxu0 0.0
    %595 = vmatmul.mubr.f32.gmra.mrb[0].mxu0 %v507
    %v596 = vpop.f32.mrb[0].mxu0
    %v597 = vadd.f32 %v484, %v596
    %v598 = vpop.f32.mrb[0].mxu0
    %599 = vmatprep.mubr.f32.mxu0 0.0
    %600 = vmatmul.mubr.f32.gmra.mrb[0].mxu0 %v510
    %v601 = vpop.f32.mrb[0].mxu0
    %v602 = vadd.f32 %v489, %v601
    %v603 = vpop.f32.mrb[0].mxu0
    %604 = vmatprep.mubr.f32.mxu0 0.0
    %605 = vmatmul.mubr.f32.gmra.mrb[0].mxu0 %v513
    %v606 = vpop.f32.mrb[0].mxu0
    %v607 = vadd.f32 %v494, %v606
    %v608 = vpop.f32.mrb[0].mxu0
    %609 = vdwg.mxu0
    %v610 = vmax.f32 %v582, 0.0
    %v611 = vmax.f32 %v587, 0.0
    %v612 = vmax.f32 %v592, 0.0
    %v613 = vld [vmem:[%s6] sm:$0xff]
    %v614 = vld [vmem:[%s6 + $0x8] sm:$0xff]
    %v615 = vld [vmem:[%s6 + $0x10] sm:$0xff]
    %v616 = vld [vmem:[%s6 + $0x18] sm:$0xff]
    %vm617 = vcmask 261120
    %v619 = vsel %vm617, %v597, 0
    %v622 = vsel %vm617, %v602, 0
    %v625 = vsel %vm617, %v607, 0
    %627 = vmatprep.subr.mxu0 0.0
    %628 = vmatpush1.msra.mxu0 %v613
    %629 = vmatprep.subr.mxu0 0.0
    %630 = vmatpush1.msra.mxu0 %v614
    %631 = vmatprep.subr.mxu0 0.0
    %632 = vmatpush1.msra.mxu0 %v615
    %633 = vmatprep.subr.mxu0 0.0
    %634 = vmatpush1.msra.mxu0 %v616
    %635 = vmatprep.subr.mxu0 0.0
    %636 = vmatpush1.msra.mxu0 0.0
    %637 = vmatprep.subr.mxu0 0.0
    %638 = vmatpush1.msra.mxu0 0.0
    %639 = vmatprep.subr.mxu0 0.0
    %640 = vmatpush1.msra.mxu0 0.0
    %641 = vmatprep.subr.mxu0 0.0
    %642 = vmatpush1.msra.mxu0 0.0
    %643 = vmatprep.subr.mxu0 0.0
    %644 = vmatpush1.msra.mxu0 0.0
    %645 = vmatprep.subr.mxu0 0.0
    %646 = vmatpush1.msra.mxu0 0.0
    %647 = vmatprep.subr.mxu0 0.0
    %648 = vmatpush1.msra.mxu0 0.0
    %649 = vmatprep.subr.mxu0 0.0
    %650 = vmatpush1.msra.mxu0 0.0
    %651 = vmatprep.subr.mxu0 0.0
    %652 = vmatpush1.msra.mxu0 0.0
    %653 = vmatprep.subr.mxu0 0.0
    %654 = vmatpush1.msra.mxu0 0.0
    %655 = vmatprep.subr.mxu0 0.0
    %656 = vmatpush1.msra.mxu0 0.0
    %657 = vmatprep.subr.mxu0 0.0
    %658 = vmatpush1.msra.mxu0 0.0
    %659 = vmatprep.subr.mxu0 0.0
    %660 = vmatpush1.msra.mxu0 0.0
    %661 = vmatprep.subr.mxu0 0.0
    %662 = vmatpush1.msra.mxu0 0.0
    %663 = vmatprep.subr.mxu0 0.0
    %664 = vmatpush1.msra.mxu0 0.0
    %665 = vmatprep.subr.mxu0 0.0
    %666 = vmatpush1.msra.mxu0 0.0
    %667 = vmatprep.subr.mxu0 0.0
    %668 = vmatpush1.msra.mxu0 0.0
    %669 = vmatprep.subr.mxu0 0.0
    %670 = vmatpush1.msra.mxu0 0.0
    %671 = vmatprep.subr.mxu0 0.0
    %672 = vmatpush1.msra.mxu0 0.0
    %673 = vmatprep.subr.mxu0 0.0
    %674 = vmatpush1.msra.mxu0 0.0
    %675 = vmatprep.subr.mxu0 0.0
    %676 = vmatpush1.msra.mxu0 0.0
    %677 = vmatprep.subr.mxu0 0.0
    %678 = vmatpush1.msra.mxu0 0.0
    %679 = vmatprep.subr.mxu0 0.0
    %680 = vmatpush1.msra.mxu0 0.0
    %681 = vmatprep.subr.mxu0 0.0
    %682 = vmatpush1.msra.mxu0 0.0
    %683 = vmatprep.subr.mxu0 0.0
    %684 = vmatpush1.msra.mxu0 0.0
    %685 = vmatprep.subr.mxu0 0.0
    %686 = vmatpush1.msra.mxu0 0.0
    %687 = vmatprep.subr.mxu0 0.0
    %688 = vmatpush1.msra.mxu0 0.0
    %689 = vmatprep.subr.mxu0 0.0
    %690 = vmatpush1.msra.mxu0 0.0
    %691 = vmatprep.mubr.f32.mxu0 0.0
    %692 = vmatmul.mubr.f32.gmra.mrb[0].mxu0 %v619
    %v693 = vpop.f32.mrb[0].mxu0
    %v694 = vadd.f32 0.0, %v693
    %v695 = vpop.f32.mrb[0].mxu0
    %696 = vmatprep.mubr.f32.mxu0 0.0
    %697 = vmatmul.mubr.f32.gmra.mrb[0].mxu0 %v622
    %v698 = vpop.f32.mrb[0].mxu0
    %v699 = vadd.f32 0.0, %v698
    %v700 = vpop.f32.mrb[0].mxu0
    %701 = vmatprep.mubr.f32.mxu0 0.0
    %702 = vmatmul.mubr.f32.gmra.mrb[0].mxu0 %v625
    %v703 = vpop.f32.mrb[0].mxu0
    %v704 = vadd.f32 0.0, %v703
    %v705 = vpop.f32.mrb[0].mxu0
    %706 = vdwg.mxu0
    %v707 = vxor.u32 %v694, 2147483648
    %v708 = vxor.u32 %v699, 2147483648
    %v709 = vxor.u32 %v704, 2147483648
    %v710 = vmul.f32 %v707, 1.442695
    %v711 = vpow.pop %v710
    %v712 = vmul.f32 %v708, 1.442695
    %v713 = vpow.pop %v712
    %v714 = vmul.f32 %v709, 1.442695
    %v715 = vpow.pop %v714
    %v716 = vadd.f32 %v711, 1.0
    %v717 = vadd.f32 %v713, 1.0
    %v718 = vadd.f32 %v715, 1.0
    %v719 = vrcp.pop %v716
    %v720 = vmul.f32 1.0, %v719
    %v721 = vrcp.pop %v717
    %v722 = vmul.f32 1.0, %v721
    %v723 = vrcp.pop %v718
    %v724 = vmul.f32 1.0, %v723
    %v725 = vld [vmem:[%s7] sm:$0x3]
    %vm726 = vcmask 15360
    %v728 = vsel %vm726, %v720, 0
    %v731 = vsel %vm726, %v722, 0
    %v734 = vsel %vm726, %v724, 0
    %vm736 = vcmask 1041408
    %v738 = vsel %vm736, %v725, 0
    %740 = vmatprep.subr.mxu0 0.0
    %741 = vmatpush1.msra.mxu0 %v738
    %742 = vmatprep.subr.mxu0 0.0
    %743 = vmatpush1.msra.mxu0 0.0
    %744 = vmatprep.subr.mxu0 0.0
    %745 = vmatpush1.msra.mxu0 0.0
    %746 = vmatprep.subr.mxu0 0.0
    %747 = vmatpush1.msra.mxu0 0.0
    %748 = vmatprep.subr.mxu0 0.0
    %749 = vmatpush1.msra.mxu0 0.0
    %750 = vmatprep.subr.mxu0 0.0
    %751 = vmatpush1.msra.mxu0 0.0
    %752 = vmatprep.subr.mxu0 0.0
    %753 = vmatpush1.msra.mxu0 0.0
    %754 = vmatprep.subr.mxu0 0.0
    %755 = vmatpush1.msra.mxu0 0.0
    %756 = vmatprep.subr.mxu0 0.0
    %757 = vmatpush1.msra.mxu0 0.0
    %758 = vmatprep.subr.mxu0 0.0
    %759 = vmatpush1.msra.mxu0 0.0
    %760 = vmatprep.subr.mxu0 0.0
    %761 = vmatpush1.msra.mxu0 0.0
    %762 = vmatprep.subr.mxu0 0.0
    %763 = vmatpush1.msra.mxu0 0.0
    %764 = vmatprep.subr.mxu0 0.0
    %765 = vmatpush1.msra.mxu0 0.0
    %766 = vmatprep.subr.mxu0 0.0
    %767 = vmatpush1.msra.mxu0 0.0
    %768 = vmatprep.subr.mxu0 0.0
    %769 = vmatpush1.msra.mxu0 0.0
    %770 = vmatprep.subr.mxu0 0.0
    %771 = vmatpush1.msra.mxu0 0.0
    %772 = vmatprep.subr.mxu0 0.0
    %773 = vmatpush1.msra.mxu0 0.0
    %774 = vmatprep.subr.mxu0 0.0
    %775 = vmatpush1.msra.mxu0 0.0
    %776 = vmatprep.subr.mxu0 0.0
    %777 = vmatpush1.msra.mxu0 0.0
    %778 = vmatprep.subr.mxu0 0.0
    %779 = vmatpush1.msra.mxu0 0.0
    %780 = vmatprep.subr.mxu0 0.0
    %781 = vmatpush1.msra.mxu0 0.0
    %782 = vmatprep.subr.mxu0 0.0
    %783 = vmatpush1.msra.mxu0 0.0
    %784 = vmatprep.subr.mxu0 0.0
    %785 = vmatpush1.msra.mxu0 0.0
    %786 = vmatprep.subr.mxu0 0.0
    %787 = vmatpush1.msra.mxu0 0.0
    %788 = vmatprep.subr.mxu0 0.0
    %789 = vmatpush1.msra.mxu0 0.0
    %790 = vmatprep.subr.mxu0 0.0
    %791 = vmatpush1.msra.mxu0 0.0
    %792 = vmatprep.subr.mxu0 0.0
    %793 = vmatpush1.msra.mxu0 0.0
    %794 = vmatprep.subr.mxu0 0.0
    %795 = vmatpush1.msra.mxu0 0.0
    %796 = vmatprep.subr.mxu0 0.0
    %797 = vmatpush1.msra.mxu0 0.0
    %798 = vmatprep.subr.mxu0 0.0
    %799 = vmatpush1.msra.mxu0 0.0
    %800 = vmatprep.subr.mxu0 0.0
    %801 = vmatpush1.msra.mxu0 0.0
    %802 = vmatprep.subr.mxu0 0.0
    %803 = vmatpush1.msra.mxu0 0.0
    %804 = vmatprep.mubr.f32.mxu0 0.0
    %805 = vmatmul.mubr.f32.gmra.mrb[0].mxu0 %v728
    %v806 = vpop.f32.mrb[0].mxu0
    %v807 = vadd.f32 0.0, %v806
    %v808 = vpop.f32.mrb[0].mxu0
    %809 = vmatprep.mubr.f32.mxu0 0.0
    %810 = vmatmul.mubr.f32.gmra.mrb[0].mxu0 %v731
    %v811 = vpop.f32.mrb[0].mxu0
    %v812 = vadd.f32 0.0, %v811
    %v813 = vpop.f32.mrb[0].mxu0
    %814 = vmatprep.mubr.f32.mxu0 0.0
    %815 = vmatmul.mubr.f32.gmra.mrb[0].mxu0 %v734
    %v816 = vpop.f32.mrb[0].mxu0
    %v817 = vadd.f32 0.0, %v816
    %v818 = vpop.f32.mrb[0].mxu0
    %819 = vdwg.mxu0
    %v820 = vmul.f32 %v610, %v807
    %v821 = vmul.f32 %v611, %v812
    %v822 = vmul.f32 %v612, %v817
    %v823 = vld [vmem:[%s8] sm:$0x1f]
    %vm824 = vcmask 64512
    %v826 = vsel %vm824, %v823, 0
    %828 = vmatprep.subr.mxu0 0.0
    %829 = vmatpush1.msra.mxu0 %v451
    %830 = vmatprep.subr.mxu0 0.0
    %831 = vmatpush1.msra.mxu0 0.0
    %832 = vmatprep.subr.mxu0 0.0
    %833 = vmatpush1.msra.mxu0 0.0
    %834 = vmatprep.subr.mxu0 0.0
    %835 = vmatpush1.msra.mxu0 0.0
    %836 = vmatprep.subr.mxu0 0.0
    %837 = vmatpush1.msra.mxu0 0.0
    %838 = vmatprep.subr.mxu0 0.0
    %839 = vmatpush1.msra.mxu0 0.0
    %840 = vmatprep.subr.mxu0 0.0
    %841 = vmatpush1.msra.mxu0 0.0
    %842 = vmatprep.subr.mxu0 0.0
    %843 = vmatpush1.msra.mxu0 0.0
    %844 = vmatprep.subr.mxu0 0.0
    %845 = vmatpush1.msra.mxu0 0.0
    %846 = vmatprep.subr.mxu0 0.0
    %847 = vmatpush1.msra.mxu0 0.0
    %848 = vmatprep.subr.mxu0 0.0
    %849 = vmatpush1.msra.mxu0 0.0
    %850 = vmatprep.subr.mxu0 0.0
    %851 = vmatpush1.msra.mxu0 0.0
    %852 = vmatprep.subr.mxu0 0.0
    %853 = vmatpush1.msra.mxu0 0.0
    %854 = vmatprep.subr.mxu0 0.0
    %855 = vmatpush1.msra.mxu0 0.0
    %856 = vmatprep.subr.mxu0 0.0
    %857 = vmatpush1.msra.mxu0 0.0
    %858 = vmatprep.subr.mxu0 0.0
    %859 = vmatpush1.msra.mxu0 0.0
    %860 = vmatprep.subr.mxu0 0.0
    %861 = vmatpush1.msra.mxu0 0.0
    %862 = vmatprep.subr.mxu0 0.0
    %863 = vmatpush1.msra.mxu0 0.0
    %864 = vmatprep.subr.mxu0 0.0
    %865 = vmatpush1.msra.mxu0 0.0
    %866 = vmatprep.subr.mxu0 0.0
    %867 = vmatpush1.msra.mxu0 0.0
    %868 = vmatprep.subr.mxu0 0.0
    %869 = vmatpush1.msra.mxu0 0.0
    %870 = vmatprep.subr.mxu0 0.0
    %871 = vmatpush1.msra.mxu0 0.0
    %872 = vmatprep.subr.mxu0 0.0
    %873 = vmatpush1.msra.mxu0 0.0
    %874 = vmatprep.subr.mxu0 0.0
    %875 = vmatpush1.msra.mxu0 0.0
    %876 = vmatprep.subr.mxu0 0.0
    %877 = vmatpush1.msra.mxu0 0.0
    %878 = vmatprep.subr.mxu0 0.0
    %879 = vmatpush1.msra.mxu0 0.0
    %880 = vmatprep.subr.mxu0 0.0
    %881 = vmatpush1.msra.mxu0 0.0
    %882 = vmatprep.subr.mxu0 0.0
    %883 = vmatpush1.msra.mxu0 0.0
    %884 = vmatprep.subr.mxu0 0.0
    %885 = vmatpush1.msra.mxu0 0.0
    %886 = vmatprep.subr.mxu0 0.0
    %887 = vmatpush1.msra.mxu0 0.0
    %888 = vmatprep.subr.mxu0 0.0
    %889 = vmatpush1.msra.mxu0 0.0
    %890 = vmatprep.subr.mxu0 0.0
    %891 = vmatpush1.msra.mxu0 0.0
    %892 = vmatprep.mubr.f32.mxu0 0.0
    %893 = vmatmul.mubr.f32.gmra.mrb[0].mxu0 %v826
    %v894 = vpop.f32.mrb[0].mxu0
    %v895 = vadd.f32 0.0, %v894
    %v896 = vpop.f32.mrb[0].mxu0
    %897 = vdwg.mxu0
    %v898 = vld [vmem:[%s9] sm:$0x1f]
    %vm899 = vcmask 195584
    %v901 = vsel %vm899, %v898, 0
    %903 = vmatprep.subr.mxu0 0.0
    %904 = vmatpush1.msra.mxu0 %v820
    %905 = vmatprep.subr.mxu0 0.0
    %906 = vmatpush1.msra.mxu0 %v821
    %907 = vmatprep.subr.mxu0 0.0
    %908 = vmatpush1.msra.mxu0 %v822
    %909 = vmatprep.subr.mxu0 0.0
    %910 = vmatpush1.msra.mxu0 0.0
    %911 = vmatprep.subr.mxu0 0.0
    %912 = vmatpush1.msra.mxu0 0.0
    %913 = vmatprep.subr.mxu0 0.0
    %914 = vmatpush1.msra.mxu0 0.0
    %915 = vmatprep.subr.mxu0 0.0
    %916 = vmatpush1.msra.mxu0 0.0
    %917 = vmatprep.subr.mxu0 0.0
    %918 = vmatpush1.msra.mxu0 0.0
    %919 = vmatprep.subr.mxu0 0.0
    %920 = vmatpush1.msra.mxu0 0.0
    %921 = vmatprep.subr.mxu0 0.0
    %922 = vmatpush1.msra.mxu0 0.0
    %923 = vmatprep.subr.mxu0 0.0
    %924 = vmatpush1.msra.mxu0 0.0
    %925 = vmatprep.subr.mxu0 0.0
    %926 = vmatpush1.msra.mxu0 0.0
    %927 = vmatprep.subr.mxu0 0.0
    %928 = vmatpush1.msra.mxu0 0.0
    %929 = vmatprep.subr.mxu0 0.0
    %930 = vmatpush1.msra.mxu0 0.0
    %931 = vmatprep.subr.mxu0 0.0
    %932 = vmatpush1.msra.mxu0 0.0
    %933 = vmatprep.subr.mxu0 0.0
    %934 = vmatpush1.msra.mxu0 0.0
    %935 = vmatprep.subr.mxu0 0.0
    %936 = vmatpush1.msra.mxu0 0.0
    %937 = vmatprep.subr.mxu0 0.0
    %938 = vmatpush1.msra.mxu0 0.0
    %939 = vmatprep.subr.mxu0 0.0
    %940 = vmatpush1.msra.mxu0 0.0
    %941 = vmatprep.subr.mxu0 0.0
    %942 = vmatpush1.msra.mxu0 0.0
    %943 = vmatprep.subr.mxu0 0.0
    %944 = vmatpush1.msra.mxu0 0.0
    %945 = vmatprep.subr.mxu0 0.0
    %946 = vmatpush1.msra.mxu0 0.0
    %947 = vmatprep.subr.mxu0 0.0
    %948 = vmatpush1.msra.mxu0 0.0
    %949 = vmatprep.subr.mxu0 0.0
    %950 = vmatpush1.msra.mxu0 0.0
    %951 = vmatprep.subr.mxu0 0.0
    %952 = vmatpush1.msra.mxu0 0.0
    %953 = vmatprep.subr.mxu0 0.0
    %954 = vmatpush1.msra.mxu0 0.0
    %955 = vmatprep.subr.mxu0 0.0
    %956 = vmatpush1.msra.mxu0 0.0
    %957 = vmatprep.subr.mxu0 0.0
    %958 = vmatpush1.msra.mxu0 0.0
    %959 = vmatprep.subr.mxu0 0.0
    %960 = vmatpush1.msra.mxu0 0.0
    %961 = vmatprep.subr.mxu0 0.0
    %962 = vmatpush1.msra.mxu0 0.0
    %963 = vmatprep.subr.mxu0 0.0
    %964 = vmatpush1.msra.mxu0 0.0
    %965 = vmatprep.subr.mxu0 0.0
    %966 = vmatpush1.msra.mxu0 0.0
    %967 = vmatprep.mubr.f32.mxu0 0.0
    %968 = vmatmul.mubr.f32.gmra.mrb[0].mxu0 %v901
    %v969 = vpop.f32.mrb[0].mxu0
    %v970 = vadd.f32 0.0, %v969
    %v971 = vpop.f32.mrb[0].mxu0
    %972 = vdwg.mxu0
    %v973 = vld [vmem:[%s11] sm:$0xff]
    %v974 = vld [vmem:[%s11 + $0x8] sm:$0xff]
    %v975 = vld [vmem:[%s11 + $0x10] sm:$0xff]
    %v976 = vld [vmem:[%s11 + $0x18] sm:$0xff]
    %v977 = vld [vmem:[%s11 + $0x20] sm:$0xff]
    %v978 = vld [vmem:[%s11 + $0x28] sm:$0xff]
    %v979 = vld [vmem:[%s11 + $0x30] sm:$0xff]
    %v980 = vld [vmem:[%s11 + $0x38] sm:$0xff]
    %v981 = vld [vmem:[%s11 + $0x40] sm:$0xff]
    %v982 = vld [vmem:[%s11 + $0x48] sm:$0xff]
    %v983 = vld [vmem:[%s11 + $0x50] sm:$0xff]
    %v984 = vld [vmem:[%s11 + $0x58] sm:$0xff]
    %v985 = vld [vmem:[%s11 + $0x60] sm:$0xff]
    %v986 = vld [vmem:[%s11 + $0x68] sm:$0xff]
    %v987 = vld [vmem:[%s11 + $0x70] sm:$0xff]
    %v988 = vld [vmem:[%s11 + $0x78] sm:$0xff]
    %v989 = vld [vmem:[%s11 + $0x80] sm:$0xff]
    %v990 = vld [vmem:[%s11 + $0x88] sm:$0xff]
    %v991 = vld [vmem:[%s11 + $0x90] sm:$0xff]
    %v992 = vld [vmem:[%s11 + $0x98] sm:$0xff]
    %v993 = vld [vmem:[%s11 + $0xa0] sm:$0xff]
    %v994 = vld [vmem:[%s11 + $0xa8] sm:$0xff]
    %v995 = vld [vmem:[%s11 + $0xb0] sm:$0xff]
    %v996 = vld [vmem:[%s11 + $0xb8] sm:$0xff]
    %v997 = vld [vmem:[%s11 + $0xc0] sm:$0xff]
    %v998 = vld [vmem:[%s11 + $0xc8] sm:$0xff]
    %v999 = vld [vmem:[%s11 + $0xd0] sm:$0xff]
    %v1000 = vld [vmem:[%s11 + $0xd8] sm:$0xff]
    %v1001 = vld [vmem:[%s11 + $0xe0] sm:$0xff]
    %v1002 = vld [vmem:[%s11 + $0xe8] sm:$0xff]
    %v1003 = vld [vmem:[%s11 + $0xf0] sm:$0xff]
    %v1004 = vld [vmem:[%s11 + $0xf8] sm:$0xff]
    %v1005 = vld [vmem:[%s11 + $0x100] sm:$0xff]
    %v1006 = vld [vmem:[%s11 + $0x108] sm:$0xff]
    %v1007 = vld [vmem:[%s11 + $0x110] sm:$0xff]
    %v1008 = vld [vmem:[%s11 + $0x118] sm:$0xff]
    %v1009 = vld [vmem:[%s11 + $0x120] sm:$0xff]
    %v1010 = vld [vmem:[%s11 + $0x128] sm:$0xff]
    %v1011 = vld [vmem:[%s11 + $0x130] sm:$0xff]
    %v1012 = vld [vmem:[%s11 + $0x138] sm:$0xff]
    %v1013 = vld [vmem:[%s11 + $0x140] sm:$0xff]
    %v1014 = vld [vmem:[%s11 + $0x148] sm:$0xff]
    %v1015 = vld [vmem:[%s11 + $0x150] sm:$0xff]
    %v1016 = vld [vmem:[%s11 + $0x158] sm:$0xff]
    %v1017 = vld [vmem:[%s11 + $0x160] sm:$0xff]
    %v1018 = vld [vmem:[%s11 + $0x168] sm:$0xff]
    %v1019 = vld [vmem:[%s11 + $0x170] sm:$0xff]
    %v1020 = vld [vmem:[%s11 + $0x178] sm:$0xff]
    %v1021 = vld [vmem:[%s11 + $0x180] sm:$0xff]
    %v1022 = vld [vmem:[%s11 + $0x188] sm:$0xff]
    %v1023 = vld [vmem:[%s11 + $0x190] sm:$0xff]
    %v1024 = vld [vmem:[%s11 + $0x198] sm:$0xff]
    %v1025 = vld [vmem:[%s11 + $0x1a0] sm:$0xff]
    %v1026 = vld [vmem:[%s11 + $0x1a8] sm:$0xff]
    %v1027 = vld [vmem:[%s11 + $0x1b0] sm:$0xff]
    %v1028 = vld [vmem:[%s11 + $0x1b8] sm:$0xff]
    %v1029 = vld [vmem:[%s11 + $0x1c0] sm:$0xff]
    %v1030 = vld [vmem:[%s11 + $0x1c8] sm:$0xff]
    %v1031 = vld [vmem:[%s11 + $0x1d0] sm:$0xff]
    %v1032 = vld [vmem:[%s11 + $0x1d8] sm:$0xff]
    %v1033 = vld [vmem:[%s11 + $0x1e0] sm:$0xff]
    %v1034 = vld [vmem:[%s11 + $0x1e8] sm:$0xff]
    %v1035 = vld [vmem:[%s11 + $0x1f0] sm:$0xff]
    %v1036 = vld [vmem:[%s11 + $0x1f8] sm:$0xff]
    %v1037 = vld [vmem:[%s11 + $0x200] sm:$0xff]
    %v1038 = vld [vmem:[%s11 + $0x208] sm:$0xff]
    %v1039 = vld [vmem:[%s11 + $0x210] sm:$0xff]
    %v1040 = vld [vmem:[%s11 + $0x218] sm:$0xff]
    %v1041 = vld [vmem:[%s11 + $0x220] sm:$0xff]
    %v1042 = vld [vmem:[%s11 + $0x228] sm:$0xff]
    %v1043 = vld [vmem:[%s11 + $0x230] sm:$0xff]
    %v1044 = vld [vmem:[%s11 + $0x238] sm:$0xff]
    %v1045 = vld [vmem:[%s11 + $0x240] sm:$0xff]
    %v1046 = vld [vmem:[%s11 + $0x248] sm:$0xff]
    %v1047 = vld [vmem:[%s11 + $0x250] sm:$0xff]
    %v1048 = vld [vmem:[%s11 + $0x258] sm:$0xff]
    %v1049 = vld [vmem:[%s11 + $0x260] sm:$0xff]
    %v1050 = vld [vmem:[%s11 + $0x268] sm:$0xff]
    %v1051 = vld [vmem:[%s11 + $0x270] sm:$0xff]
    %v1052 = vld [vmem:[%s11 + $0x278] sm:$0xff]
    %v1054 = vsel %vm617, %v970, 0
    %1056 = vmatprep.subr.mxu0 %v1038
    %1057 = vmatpush1.msra.mxu0 %v1037
    %1058 = vmatprep.subr.mxu0 %v1042
    %1059 = vmatpush1.msra.mxu0 %v1041
    %1060 = vmatprep.subr.mxu0 %v1046
    %1061 = vmatpush1.msra.mxu0 %v1045
    %1062 = vmatprep.subr.mxu0 %v1050
    %1063 = vmatpush1.msra.mxu0 %v1049
    %1064 = vmatprep.subr.mxu0 0.0
    %1065 = vmatpush1.msra.mxu0 0.0
    %1066 = vmatprep.subr.mxu0 0.0
    %1067 = vmatpush1.msra.mxu0 0.0
    %1068 = vmatprep.subr.mxu0 0.0
    %1069 = vmatpush1.msra.mxu0 0.0
    %1070 = vmatprep.subr.mxu0 0.0
    %1071 = vmatpush1.msra.mxu0 0.0
    %1072 = vmatprep.subr.mxu0 0.0
    %1073 = vmatpush1.msra.mxu0 0.0
    %1074 = vmatprep.subr.mxu0 0.0
    %1075 = vmatpush1.msra.mxu0 0.0
    %1076 = vmatprep.subr.mxu0 0.0
    %1077 = vmatpush1.msra.mxu0 0.0
    %1078 = vmatprep.subr.mxu0 0.0
    %1079 = vmatpush1.msra.mxu0 0.0
    %1080 = vmatprep.subr.mxu0 0.0
    %1081 = vmatpush1.msra.mxu0 0.0
    %1082 = vmatprep.subr.mxu0 0.0
    %1083 = vmatpush1.msra.mxu0 0.0
    %1084 = vmatprep.subr.mxu0 0.0
    %1085 = vmatpush1.msra.mxu0 0.0
    %1086 = vmatprep.subr.mxu0 0.0
    %1087 = vmatpush1.msra.mxu0 0.0
    %1088 = vmatprep.subr.mxu0 0.0
    %1089 = vmatpush1.msra.mxu0 0.0
    %1090 = vmatprep.subr.mxu0 0.0
    %1091 = vmatpush1.msra.mxu0 0.0
    %1092 = vmatprep.subr.mxu0 0.0
    %1093 = vmatpush1.msra.mxu0 0.0
    %1094 = vmatprep.subr.mxu0 0.0
    %1095 = vmatpush1.msra.mxu0 0.0
    %1096 = vmatprep.subr.mxu0 0.0
    %1097 = vmatpush1.msra.mxu0 0.0
    %1098 = vmatprep.subr.mxu0 0.0
    %1099 = vmatpush1.msra.mxu0 0.0
    %1100 = vmatprep.subr.mxu0 0.0
    %1101 = vmatpush1.msra.mxu0 0.0
    %1102 = vmatprep.subr.mxu0 0.0
    %1103 = vmatpush1.msra.mxu0 0.0
    %1104 = vmatprep.subr.mxu0 0.0
    %1105 = vmatpush1.msra.mxu0 0.0
    %1106 = vmatprep.subr.mxu0 0.0
    %1107 = vmatpush1.msra.mxu0 0.0
    %1108 = vmatprep.subr.mxu0 0.0
    %1109 = vmatpush1.msra.mxu0 0.0
    %1110 = vmatprep.subr.mxu0 0.0
    %1111 = vmatpush1.msra.mxu0 0.0
    %1112 = vmatprep.subr.mxu0 0.0
    %1113 = vmatpush1.msra.mxu0 0.0
    %1114 = vmatprep.subr.mxu0 0.0
    %1115 = vmatpush1.msra.mxu0 0.0
    %1116 = vmatprep.subr.mxu0 0.0
    %1117 = vmatpush1.msra.mxu0 0.0
    %1118 = vmatprep.subr.mxu0 0.0
    %1119 = vmatpush1.msra.mxu0 0.0
    %1120 = vmatprep.mubr.f32.mxu0 0.0
    %1121 = vmatmul.mubr.f32.gmra.mrb[0].mxu0 %v1054
    %v1122 = vpop.f32.mrb[0].mxu0
    %v1123 = vadd.f32 0.0, %v1122
    %v1124 = vpop.f32.mrb[0].mxu0
    %v1125 = vadd.f32 0.0, %v1124
    %1126 = vdwg.mxu0
    %1127 = vmatprep.subr.mxu0 %v1040
    %1128 = vmatpush1.msra.mxu0 %v1039
    %1129 = vmatprep.subr.mxu0 %v1044
    %1130 = vmatpush1.msra.mxu0 %v1043
    %1131 = vmatprep.subr.mxu0 %v1048
    %1132 = vmatpush1.msra.mxu0 %v1047
    %1133 = vmatprep.subr.mxu0 %v1052
    %1134 = vmatpush1.msra.mxu0 %v1051
    %1135 = vmatprep.subr.mxu0 0.0
    %1136 = vmatpush1.msra.mxu0 0.0
    %1137 = vmatprep.subr.mxu0 0.0
    %1138 = vmatpush1.msra.mxu0 0.0
    %1139 = vmatprep.subr.mxu0 0.0
    %1140 = vmatpush1.msra.mxu0 0.0
    %1141 = vmatprep.subr.mxu0 0.0
    %1142 = vmatpush1.msra.mxu0 0.0
    %1143 = vmatprep.subr.mxu0 0.0
    %1144 = vmatpush1.msra.mxu0 0.0
    %1145 = vmatprep.subr.mxu0 0.0
    %1146 = vmatpush1.msra.mxu0 0.0
    %1147 = vmatprep.subr.mxu0 0.0
    %1148 = vmatpush1.msra.mxu0 0.0
    %1149 = vmatprep.subr.mxu0 0.0
    %1150 = vmatpush1.msra.mxu0 0.0
    %1151 = vmatprep.subr.mxu0 0.0
    %1152 = vmatpush1.msra.mxu0 0.0
    %1153 = vmatprep.subr.mxu0 0.0
    %1154 = vmatpush1.msra.mxu0 0.0
    %1155 = vmatprep.subr.mxu0 0.0
    %1156 = vmatpush1.msra.mxu0 0.0
    %1157 = vmatprep.subr.mxu0 0.0
    %1158 = vmatpush1.msra.mxu0 0.0
    %1159 = vmatprep.subr.mxu0 0.0
    %1160 = vmatpush1.msra.mxu0 0.0
    %1161 = vmatprep.subr.mxu0 0.0
    %1162 = vmatpush1.msra.mxu0 0.0
    %1163 = vmatprep.subr.mxu0 0.0
    %1164 = vmatpush1.msra.mxu0 0.0
    %1165 = vmatprep.subr.mxu0 0.0
    %1166 = vmatpush1.msra.mxu0 0.0
    %1167 = vmatprep.subr.mxu0 0.0
    %1168 = vmatpush1.msra.mxu0 0.0
    %1169 = vmatprep.subr.mxu0 0.0
    %1170 = vmatpush1.msra.mxu0 0.0
    %1171 = vmatprep.subr.mxu0 0.0
    %1172 = vmatpush1.msra.mxu0 0.0
    %1173 = vmatprep.subr.mxu0 0.0
    %1174 = vmatpush1.msra.mxu0 0.0
    %1175 = vmatprep.subr.mxu0 0.0
    %1176 = vmatpush1.msra.mxu0 0.0
    %1177 = vmatprep.subr.mxu0 0.0
    %1178 = vmatpush1.msra.mxu0 0.0
    %1179 = vmatprep.subr.mxu0 0.0
    %1180 = vmatpush1.msra.mxu0 0.0
    %1181 = vmatprep.subr.mxu0 0.0
    %1182 = vmatpush1.msra.mxu0 0.0
    %1183 = vmatprep.subr.mxu0 0.0
    %1184 = vmatpush1.msra.mxu0 0.0
    %1185 = vmatprep.subr.mxu0 0.0
    %1186 = vmatpush1.msra.mxu0 0.0
    %1187 = vmatprep.subr.mxu0 0.0
    %1188 = vmatpush1.msra.mxu0 0.0
    %1189 = vmatprep.subr.mxu0 0.0
    %1190 = vmatpush1.msra.mxu0 0.0
    %1191 = vmatprep.mubr.f32.mxu0 0.0
    %1192 = vmatmul.mubr.f32.gmra.mrb[0].mxu0 %v1054
    %v1193 = vpop.f32.mrb[0].mxu0
    %v1194 = vadd.f32 0.0, %v1193
    %v1195 = vpop.f32.mrb[0].mxu0
    %v1196 = vadd.f32 0.0, %v1195
    %1197 = vdwg.mxu0
    %1198 = vmatprep.subr.mxu0 %v974
    %1199 = vmatpush1.msra.mxu0 %v973
    %1200 = vmatprep.subr.mxu0 %v978
    %1201 = vmatpush1.msra.mxu0 %v977
    %1202 = vmatprep.subr.mxu0 %v982
    %1203 = vmatpush1.msra.mxu0 %v981
    %1204 = vmatprep.subr.mxu0 %v986
    %1205 = vmatpush1.msra.mxu0 %v985
    %1206 = vmatprep.subr.mxu0 %v990
    %1207 = vmatpush1.msra.mxu0 %v989
    %1208 = vmatprep.subr.mxu0 %v994
    %1209 = vmatpush1.msra.mxu0 %v993
    %1210 = vmatprep.subr.mxu0 %v998
    %1211 = vmatpush1.msra.mxu0 %v997
    %1212 = vmatprep.subr.mxu0 %v1002
    %1213 = vmatpush1.msra.mxu0 %v1001
    %1214 = vmatprep.subr.mxu0 %v1006
    %1215 = vmatpush1.msra.mxu0 %v1005
    %1216 = vmatprep.subr.mxu0 %v1010
    %1217 = vmatpush1.msra.mxu0 %v1009
    %1218 = vmatprep.subr.mxu0 %v1014
    %1219 = vmatpush1.msra.mxu0 %v1013
    %1220 = vmatprep.subr.mxu0 %v1018
    %1221 = vmatpush1.msra.mxu0 %v1017
    %1222 = vmatprep.subr.mxu0 %v1022
    %1223 = vmatpush1.msra.mxu0 %v1021
    %1224 = vmatprep.subr.mxu0 %v1026
    %1225 = vmatpush1.msra.mxu0 %v1025
    %1226 = vmatprep.subr.mxu0 %v1030
    %1227 = vmatpush1.msra.mxu0 %v1029
    %1228 = vmatprep.subr.mxu0 %v1034
    %1229 = vmatpush1.msra.mxu0 %v1033
    %1230 = vmatprep.subr.mxu0 0.0
    %1231 = vmatpush1.msra.mxu0 0.0
    %1232 = vmatprep.subr.mxu0 0.0
    %1233 = vmatpush1.msra.mxu0 0.0
    %1234 = vmatprep.subr.mxu0 0.0
    %1235 = vmatpush1.msra.mxu0 0.0
    %1236 = vmatprep.subr.mxu0 0.0
    %1237 = vmatpush1.msra.mxu0 0.0
    %1238 = vmatprep.subr.mxu0 0.0
    %1239 = vmatpush1.msra.mxu0 0.0
    %1240 = vmatprep.subr.mxu0 0.0
    %1241 = vmatpush1.msra.mxu0 0.0
    %1242 = vmatprep.subr.mxu0 0.0
    %1243 = vmatpush1.msra.mxu0 0.0
    %1244 = vmatprep.subr.mxu0 0.0
    %1245 = vmatpush1.msra.mxu0 0.0
    %1246 = vmatprep.subr.mxu0 0.0
    %1247 = vmatpush1.msra.mxu0 0.0
    %1248 = vmatprep.subr.mxu0 0.0
    %1249 = vmatpush1.msra.mxu0 0.0
    %1250 = vmatprep.subr.mxu0 0.0
    %1251 = vmatpush1.msra.mxu0 0.0
    %1252 = vmatprep.subr.mxu0 0.0
    %1253 = vmatpush1.msra.mxu0 0.0
    %1254 = vmatprep.subr.mxu0 0.0
    %1255 = vmatpush1.msra.mxu0 0.0
    %1256 = vmatprep.subr.mxu0 0.0
    %1257 = vmatpush1.msra.mxu0 0.0
    %1258 = vmatprep.subr.mxu0 0.0
    %1259 = vmatpush1.msra.mxu0 0.0
    %1260 = vmatprep.subr.mxu0 0.0
    %1261 = vmatpush1.msra.mxu0 0.0
    %1262 = vmatprep.mubr.f32.mxu0 0.0
    %1263 = vmatmul.mubr.f32.gmra.mrb[0].mxu0 %v895
    %v1264 = vpop.f32.mrb[0].mxu0
    %v1265 = vadd.f32 %v1123, %v1264
    %v1266 = vpop.f32.mrb[0].mxu0
    %v1267 = vadd.f32 %v1125, %v1266
    %1268 = vdwg.mxu0
    %1269 = vmatprep.subr.mxu0 %v976
    %1270 = vmatpush1.msra.mxu0 %v975
    %1271 = vmatprep.subr.mxu0 %v980
    %1272 = vmatpush1.msra.mxu0 %v979
    %1273 = vmatprep.subr.mxu0 %v984
    %1274 = vmatpush1.msra.mxu0 %v983
    %1275 = vmatprep.subr.mxu0 %v988
    %1276 = vmatpush1.msra.mxu0 %v987
    %1277 = vmatprep.subr.mxu0 %v992
    %1278 = vmatpush1.msra.mxu0 %v991
    %1279 = vmatprep.subr.mxu0 %v996
    %1280 = vmatpush1.msra.mxu0 %v995
    %1281 = vmatprep.subr.mxu0 %v1000
    %1282 = vmatpush1.msra.mxu0 %v999
    %1283 = vmatprep.subr.mxu0 %v1004
    %1284 = vmatpush1.msra.mxu0 %v1003
    %1285 = vmatprep.subr.mxu0 %v1008
    %1286 = vmatpush1.msra.mxu0 %v1007
    %1287 = vmatprep.subr.mxu0 %v1012
    %1288 = vmatpush1.msra.mxu0 %v1011
    %1289 = vmatprep.subr.mxu0 %v1016
    %1290 = vmatpush1.msra.mxu0 %v1015
    %1291 = vmatprep.subr.mxu0 %v1020
    %1292 = vmatpush1.msra.mxu0 %v1019
    %1293 = vmatprep.subr.mxu0 %v1024
    %1294 = vmatpush1.msra.mxu0 %v1023
    %1295 = vmatprep.subr.mxu0 %v1028
    %1296 = vmatpush1.msra.mxu0 %v1027
    %1297 = vmatprep.subr.mxu0 %v1032
    %1298 = vmatpush1.msra.mxu0 %v1031
    %1299 = vmatprep.subr.mxu0 %v1036
    %1300 = vmatpush1.msra.mxu0 %v1035
    %1301 = vmatprep.subr.mxu0 0.0
    %1302 = vmatpush1.msra.mxu0 0.0
    %1303 = vmatprep.subr.mxu0 0.0
    %1304 = vmatpush1.msra.mxu0 0.0
    %1305 = vmatprep.subr.mxu0 0.0
    %1306 = vmatpush1.msra.mxu0 0.0
    %1307 = vmatprep.subr.mxu0 0.0
    %1308 = vmatpush1.msra.mxu0 0.0
    %1309 = vmatprep.subr.mxu0 0.0
    %1310 = vmatpush1.msra.mxu0 0.0
    %1311 = vmatprep.subr.mxu0 0.0
    %1312 = vmatpush1.msra.mxu0 0.0
    %1313 = vmatprep.subr.mxu0 0.0
    %1314 = vmatpush1.msra.mxu0 0.0
    %1315 = vmatprep.subr.mxu0 0.0
    %1316 = vmatpush1.msra.mxu0 0.0
    %1317 = vmatprep.subr.mxu0 0.0
    %1318 = vmatpush1.msra.mxu0 0.0
    %1319 = vmatprep.subr.mxu0 0.0
    %1320 = vmatpush1.msra.mxu0 0.0
    %1321 = vmatprep.subr.mxu0 0.0
    %1322 = vmatpush1.msra.mxu0 0.0
    %1323 = vmatprep.subr.mxu0 0.0
    %1324 = vmatpush1.msra.mxu0 0.0
    %1325 = vmatprep.subr.mxu0 0.0
    %1326 = vmatpush1.msra.mxu0 0.0
    %1327 = vmatprep.subr.mxu0 0.0
    %1328 = vmatpush1.msra.mxu0 0.0
    %1329 = vmatprep.subr.mxu0 0.0
    %1330 = vmatpush1.msra.mxu0 0.0
    %1331 = vmatprep.subr.mxu0 0.0
    %1332 = vmatpush1.msra.mxu0 0.0
    %1333 = vmatprep.mubr.f32.mxu0 0.0
    %1334 = vmatmul.mubr.f32.gmra.mrb[0].mxu0 %v895
    %v1335 = vpop.f32.mrb[0].mxu0
    %v1336 = vadd.f32 %v1194, %v1335
    %v1337 = vpop.f32.mrb[0].mxu0
    %v1338 = vadd.f32 %v1196, %v1337
    %1339 = vdwg.mxu0
    %v1340 = vld [vmem:[%s10] sm:$0x1f]
    %1342 = vset.pattern.permute.xlu0 0
    %1343 = vperm.xlu0 %1342, %v1340
    %v1344 = vpop.permute.xlu0 %1343
    %v1346 = vadd.f32 %v1265, %v1344
    %v1347 = vadd.f32 %v1267, %v1344
    %v1348 = vadd.f32 %v1336, %v1344
    %v1349 = vadd.f32 %v1338, %v1344
    %1350 = vst [vmem:[%s12] sm:$0x1f] %v1346
    %1351 = vst [vmem:[%s12 + $0x8] sm:$0x1f] %v1347
    %1352 = vst [vmem:[%s12 + $0x10] sm:$0x1f] %v1348
    %1353 = vst [vmem:[%s12 + $0x18] sm:$0x1f] %v1349
    // Predicated region
    $region54: #{wrapper_forward.1} parent=1 // pred_check
      _
    $region55: #{wrapper_forward.1} parent=1 // pred_check_branch
      %1355 = sbr.rel (0) target = $region57
    $region56: #{wrapper_forward.1} parent=1 // pred_region
      _
    $region57: #{wrapper_forward.1} parent=1 // pred_fallthru
      _
    // Predicated region
    $region58: #{wrapper_forward.1} parent=1 // pred_check
      _
    $region59: #{wrapper_forward.1} parent=1 // pred_check_branch
      %1357 = sbr.rel (0) target = $region61
    $region60: #{wrapper_forward.1} parent=1 // pred_region
      _
    $region61: #{wrapper_forward.1} parent=1 // pred_fallthru
      _
    %1358 = vsyncpa [#allocation3], 1

</llo_original>
